<compile_context>
chip_gen: v7x
topology: tpu7x:2x2x1
jax: 0.10.0
libtpu: 0.0.40
codegen_flags: <defaults>
</compile_context>

<pallas_src>
import math
import jax
import jax.numpy as jnp
from jax import lax
from jax.experimental import pallas as pl
from jax.experimental.pallas import tpu as pltpu

EPS = 1e-6


def _tpu_generation_ge_6():
    """Best-effort check for a 256-wide MXU / bf16-EUP chip (v6e, v7x)."""
    try:
        kind = jax.devices()[0].device_kind.lower()
    except Exception:
        return False
    return ("v6" in kind) or ("v7" in kind)


def make_encoder_layer(B, S, D, DFF, H, TQ, exp_bf16):
    """Builds a pallas_call running the whole encoder layer, grid=(B, S//TQ)."""
    assert D % H == 0
    assert S % TQ == 0
    dk = D // H

    def kernel(xq_ref, xf_ref, mask_ref,
               wq_ref, bq_ref, wk_ref, bk_ref, wv_ref, bv_ref,
               wo_ref, bo_ref, w1_ref, b1_ref, w2_ref, b2_ref,
               out_ref, k_scr, v_scr, cat_scr):

        def ln_hat(v):
            # Annotated-Transformer LN without gain/shift (folded into the
            # following matmul in the wrapper): (x - mean) / (unbiased_std + eps)
            mean = jnp.mean(v, axis=-1, keepdims=True)
            c = v - mean
            var = jnp.sum(c * c, axis=-1, keepdims=True) * (1.0 / (D - 1))
            inv = pl.reciprocal(jnp.sqrt(var) + EPS, approx=True)   # EUP slot
            return c * inv

        # ---- once per batch index: LN over the full sequence + K/V projections.
        # k_scr / v_scr persist across the qi grid axis (marked "arbitrary"),
        # removing the S/TQ-fold recompute of the largest matmuls.
        @pl.when(pl.program_id(1) == 0)
        def _():
            xn_f = ln_hat(xf_ref[0].astype(jnp.float32)).astype(jnp.bfloat16)
            k = (jnp.dot(xn_f, wk_ref[...], preferred_element_type=jnp.float32)
                 + bk_ref[...]).astype(jnp.bfloat16)
            for h in range(H):                       # per-head layout, stored once
                k_scr[h] = k[:, h * dk:(h + 1) * dk]
            # V after K so only one f32 (S, D) intermediate is live at a time.
            v = (jnp.dot(xn_f, wv_ref[...], preferred_element_type=jnp.float32)
                 + bv_ref[...]).astype(jnp.bfloat16)
            for h in range(H):
                v_scr[h] = v[:, h * dk:(h + 1) * dk]

        x_q = xq_ref[0]                              # (TQ, D) f32 residual stream
        mask = mask_ref[0]                           # (1,  S) f32; 1=keep 0=masked
        masked = jnp.broadcast_to(mask, (TQ, S)) == 0.0   # hoisted out of head loop

        # ----------------- Sublayer 0: multi-head self-attention ----------------
        # wq/bq already carry the LN1 gain/shift and the 1/sqrt(dk) scale.
        xn_q = ln_hat(x_q).astype(jnp.bfloat16)
        q = jnp.dot(xn_q, wq_ref[...], preferred_element_type=jnp.float32) + bq_ref[...]
        q16 = q.astype(jnp.bfloat16)

        for h in range(H):                           # static unroll over heads
            lo = h * dk
            qh = q16[:, lo:lo + dk]                  # (TQ, dk) bf16
            kh = k_scr[h]                            # (S,  dk) bf16 (cached)
            vh = v_scr[h]                            # (S,  dk) bf16 (cached)
            scores = lax.dot_general(                # (TQ, S) = qh @ kh^T
                qh, kh, (((1,), (1,)), ((), ())),
                preferred_element_type=jnp.float32)
            # Exact masked_fill semantics in f32 (before any bf16 cast).
            scores = jnp.where(masked, -1e9, scores)
            m = jnp.max(scores, axis=-1, keepdims=True)
            if exp_bf16:                             # bf16 EUP on v6e / v7x
                p = jnp.exp((scores - m).astype(jnp.bfloat16))
                l = jnp.sum(p.astype(jnp.float32), axis=-1, keepdims=True)
            else:                                    # f32 EUP path (v5e and older)
                pf = jnp.exp(scores - m)
                l = jnp.sum(pf, axis=-1, keepdims=True)
                p = pf.astype(jnp.bfloat16)
            inv_l = pl.reciprocal(l, approx=True)    # (TQ, 1) f32
            pv = jnp.dot(p, vh, preferred_element_type=jnp.float32)   # (TQ, dk)
            # Normalize after the PV matmul ((TQ,dk) multiply instead of (TQ,S))
            # and place the head slab directly (no jnp.concatenate relayout).
            cat_scr[:, lo:lo + dk] = (pv * inv_l).astype(jnp.bfloat16)

        attn = jnp.dot(cat_scr[...], wo_ref[...],
                       preferred_element_type=jnp.float32) + bo_ref[...]
        x1 = x_q + attn          # residual (dropout in eval mode = identity)

        # ----------------- Sublayer 1: position-wise feed-forward ---------------
        xn2 = ln_hat(x1).astype(jnp.bfloat16)        # w1/b1 carry LN2 gain/shift
        hdn = jnp.dot(xn2, w1_ref[...], preferred_element_type=jnp.float32) + b1_ref[...]
        hdn = jnp.maximum(hdn, 0.0).astype(jnp.bfloat16)
        ff = jnp.dot(hdn, w2_ref[...], preferred_element_type=jnp.float32) + b2_ref[...]
        out_ref[0] = x1 + ff     # residual (dropout = identity)

    def vmem_full():
        # Whole-array, non-pipelined VMEM operand: exactly one resident copy of
        # each weight / bias (replaces double-buffered constant blocks).
        return pl.BlockSpec(memory_space=pltpu.MemorySpace.VMEM)

    in_specs = [
        pl.BlockSpec((1, TQ, D), lambda b, qi: (b, qi, 0)),   # x query tile (f32)
        pl.BlockSpec((1, S, D), lambda b, qi: (b, 0, 0)),     # x full seq (bf16, K/V)
        pl.BlockSpec((1, 1, S), lambda b, qi: (b, 0, 0)),     # mask
        vmem_full(), vmem_full(),                             # wq, bq
        vmem_full(), vmem_full(),                             # wk, bk
        vmem_full(), vmem_full(),                             # wv, bv
        vmem_full(), vmem_full(),                             # wo, bo
        vmem_full(), vmem_full(),                             # ffn w1, b1
        vmem_full(), vmem_full(),                             # ffn w2, b2
    ]
    out_spec = pl.BlockSpec((1, TQ, D), lambda b, qi: (b, qi, 0))

    return pl.pallas_call(
        kernel,
        out_shape=jax.ShapeDtypeStruct((B, S, D), jnp.float32),
        grid_spec=pltpu.PrefetchScalarGridSpec(
            num_scalar_prefetch=0,
            grid=(B, S // TQ),
            in_specs=in_specs,
            out_specs=out_spec,
            scratch_shapes=[
                pltpu.VMEM((H, S, dk), jnp.bfloat16),   # cached K (per head)
                pltpu.VMEM((H, S, dk), jnp.bfloat16),   # cached V (per head)
                pltpu.VMEM((TQ, D), jnp.bfloat16),      # concatenated head outputs
            ],
        ),
        compiler_params=pltpu.CompilerParams(
            # b: parallel (megacore); qi: arbitrary so the per-batch K/V scratch
            # written at qi == 0 legally persists across the query tiles.
            dimension_semantics=("parallel", "arbitrary"),
            # Fits v7x's 64 MiB physical VMEM; above v5e/v6e scoped defaults.
            vmem_limit_bytes=48 * 1024 * 1024,
        ),
    )


def encoder_layer(x, mask, params, n_heads, tq=None):
    """Folds LN/scale into weights, casts matmul operands to bf16, runs kernel."""
    B, S, D = x.shape
    DFF = params["w1"].shape[1]
    dk = D // n_heads
    scale = 1.0 / math.sqrt(dk)

    # Fold LN gain/shift (a diagonal transform) and the 1/sqrt(dk) attention
    # scale into the first matmul of each sublayer:
    #   LN(x) @ W + b == xhat @ (diag(g) W) + (be @ W + b)
    g1c = params["g1"].reshape(D, 1)
    g2c = params["g2"].reshape(D, 1)
    wq = (params["wq"] * g1c) * scale
    bq = (params["be1"] @ params["wq"] + params["bq"]) * scale
    wk = params["wk"] * g1c
    bk = params["be1"] @ params["wk"] + params["bk"]
    wv = params["wv"] * g1c
    bv = params["be1"] @ params["wv"] + params["bv"]
    w1 = params["w1"] * g2c
    b1 = params["be2"] @ params["w1"] + params["b1"]

    gen6 = _tpu_generation_ge_6()
    if tq is None:
        # 256 fills the 256-wide MXU M dim on v6e/v7x; 128 matches v5e's MXU.
        tq_max = 256 if gen6 else 128
        if S <= tq_max:
            tq = S
        elif S % tq_max == 0:
            tq = tq_max
        elif S % 128 == 0:
            tq = 128
        else:
            tq = S            # irregular sequence length: one full-sequence tile

    # NOTE: realistic deployments should use D (and ideally dk) as multiples of
    # 128 and S a multiple of TQ for lane-dense tiles; the tiny demo shapes rely
    # on block == full array dims.
    # TODO(synk): for very long S, add a KV-tile axis (flash-style online
    # softmax) so the cached K/V footprint is a tile instead of the sequence.
    fn = make_encoder_layer(B, S, D, DFF, n_heads, tq, exp_bf16=gen6)
    bf16 = lambda a: a.astype(jnp.bfloat16)
    return fn(
        x, bf16(x), mask,
        bf16(wq), bq, bf16(wk), bk, bf16(wv), bv,
        bf16(params["wo"]), params["bo"],
        bf16(w1), b1, bf16(params["w2"]), params["b2"],
    )


def reference_encoder_layer(x, mask, p, H):
    """Pure-JAX f32 reference for correctness checking."""
    B, S, D = x.shape
    dk = D // H
    eps = 1e-6

    def ln(v, g, b):
        mean = jnp.mean(v, axis=-1, keepdims=True)
        var = jnp.sum((v - mean) ** 2, axis=-1, keepdims=True) / (D - 1)
        return g * (v - mean) / (jnp.sqrt(var) + eps) + b

    xn = ln(x, p["g1"], p["be1"])
    q = xn @ p["wq"] + p["bq"]
    k = xn @ p["wk"] + p["bk"]
    v = xn @ p["wv"] + p["bv"]
    qh = q.reshape(B, S, H, dk).transpose(0, 2, 1, 3)
    kh = k.reshape(B, S, H, dk).transpose(0, 2, 1, 3)
    vh = v.reshape(B, S, H, dk).transpose(0, 2, 1, 3)
    scores = jnp.einsum("bhqd,bhkd->bhqk", qh, kh) / math.sqrt(dk)
    scores = jnp.where(mask[:, None, :, :] == 0.0, -1e9, scores)
    attn = jax.nn.softmax(scores, axis=-1)
    o = jnp.einsum("bhqk,bhkd->bhqd", attn, vh).transpose(0, 2, 1, 3).reshape(B, S, D)
    x1 = x + (o @ p["wo"] + p["bo"])
    xn2 = ln(x1, p["g2"], p["be2"])
    ff = jnp.maximum(xn2 @ p["w1"] + p["b1"], 0.0) @ p["w2"] + p["b2"]
    return x1 + ff


if __name__ == "__main__":
    B, S, D, DFF, H = 2, 8, 32, 64, 4

    key = jax.random.PRNGKey(0)
    keys = jax.random.split(key, 12)

    def w(k, shape):
        return jax.random.normal(k, shape, dtype=jnp.float32) * 0.05

    params = {
        "wq": w(keys[0], (D, D)), "bq": jnp.zeros((1, D), jnp.float32),
        "wk": w(keys[1], (D, D)), "bk": jnp.zeros((1, D), jnp.float32),
        "wv": w(keys[2], (D, D)), "bv": jnp.zeros((1, D), jnp.float32),
        "wo": w(keys[3], (D, D)), "bo": jnp.zeros((1, D), jnp.float32),
        "g1": jnp.ones((1, D), jnp.float32), "be1": jnp.zeros((1, D), jnp.float32),
        "w1": w(keys[4], (D, DFF)), "b1": jnp.zeros((1, DFF), jnp.float32),
        "w2": w(keys[5], (DFF, D)), "b2": jnp.zeros((1, D), jnp.float32),
        "g2": jnp.ones((1, D), jnp.float32), "be2": jnp.zeros((1, D), jnp.float32),
    }

    x = jax.random.normal(keys[6], (B, S, D), dtype=jnp.float32)
    # mask: 1.0 = attend, 0.0 = masked. Mask out last 2 keys of the 2nd batch.
    mask = jnp.ones((B, 1, S), dtype=jnp.float32)
    mask = mask.at[1, 0, S - 2:].set(0.0)

    out = jax.block_until_ready(encoder_layer(x, mask, params, H))
    ref = jax.block_until_ready(reference_encoder_layer(x, mask, params, H))

    assert out.shape == (B, S, D)
    # bf16 matmul operands / bf16 K-V inputs (f32 accumulation) + approx
    # reciprocal => slightly looser tolerance vs the pure-f32 reference.
    assert jnp.allclose(out, ref, atol=2e-2, rtol=2e-2), "mismatch vs JAX reference"

    print("KERNEL_OK")
</pallas_src>

<mosaic_0001>
module attributes {stable_mosaic.version = 11 : i64} {
  func.func @kernel(%arg0: i32, %arg1: i32, %arg2: memref<1x8x32xf32, #tpu.memory_space<vmem>>, %arg3: memref<1x8x32xbf16, #tpu.memory_space<vmem>>, %arg4: memref<1x1x8xf32, #tpu.memory_space<vmem>>, %arg5: memref<32x32xbf16, #tpu.memory_space<vmem>>, %arg6: memref<1x32xf32, #tpu.memory_space<vmem>>, %arg7: memref<32x32xbf16, #tpu.memory_space<vmem>>, %arg8: memref<1x32xf32, #tpu.memory_space<vmem>>, %arg9: memref<32x32xbf16, #tpu.memory_space<vmem>>, %arg10: memref<1x32xf32, #tpu.memory_space<vmem>>, %arg11: memref<32x32xbf16, #tpu.memory_space<vmem>>, %arg12: memref<1x32xf32, #tpu.memory_space<vmem>>, %arg13: memref<32x64xbf16, #tpu.memory_space<vmem>>, %arg14: memref<1x64xf32, #tpu.memory_space<vmem>>, %arg15: memref<64x32xbf16, #tpu.memory_space<vmem>>, %arg16: memref<1x32xf32, #tpu.memory_space<vmem>>, %arg17: memref<1x8x32xf32, #tpu.memory_space<vmem>>, %arg18: memref<4x8x8xbf16, #tpu.memory_space<vmem>>, %arg19: memref<4x8x8xbf16, #tpu.memory_space<vmem>>, %arg20: memref<8x32xbf16, #tpu.memory_space<vmem>>) attributes {dimension_semantics = [#tpu.dimension_semantics<parallel>, #tpu.dimension_semantics<arbitrary>], iteration_bounds = array<i64: 2, 1>, scalar_prefetch = 0 : i64, scratch_operands = 3 : i64, tpu.core_type = #tpu.core_type<tc>, window_params = [{transform_indices = @transform_0, window_bounds = array<i64: 1, 8, 32>}, {transform_indices = @transform_1, window_bounds = array<i64: 1, 8, 32>}, {transform_indices = @transform_2, window_bounds = array<i64: 1, 1, 8>}, {pipeline_mode = #tpu.pipeline_mode<synchronous>, transform_indices = @transform_3, window_bounds = array<i64: 32, 32>}, {pipeline_mode = #tpu.pipeline_mode<synchronous>, transform_indices = @transform_4, window_bounds = array<i64: 1, 32>}, {pipeline_mode = #tpu.pipeline_mode<synchronous>, transform_indices = @transform_5, window_bounds = array<i64: 32, 32>}, {pipeline_mode = #tpu.pipeline_mode<synchronous>, transform_indices = @transform_6, window_bounds = array<i64: 1, 32>}, {pipeline_mode = #tpu.pipeline_mode<synchronous>, transform_indices = @transform_7, window_bounds = array<i64: 32, 32>}, {pipeline_mode = #tpu.pipeline_mode<synchronous>, transform_indices = @transform_8, window_bounds = array<i64: 1, 32>}, {pipeline_mode = #tpu.pipeline_mode<synchronous>, transform_indices = @transform_9, window_bounds = array<i64: 32, 32>}, {pipeline_mode = #tpu.pipeline_mode<synchronous>, transform_indices = @transform_10, window_bounds = array<i64: 1, 32>}, {pipeline_mode = #tpu.pipeline_mode<synchronous>, transform_indices = @transform_11, window_bounds = array<i64: 32, 64>}, {pipeline_mode = #tpu.pipeline_mode<synchronous>, transform_indices = @transform_12, window_bounds = array<i64: 1, 64>}, {pipeline_mode = #tpu.pipeline_mode<synchronous>, transform_indices = @transform_13, window_bounds = array<i64: 64, 32>}, {pipeline_mode = #tpu.pipeline_mode<synchronous>, transform_indices = @transform_14, window_bounds = array<i64: 1, 32>}, {transform_indices = @transform_15, window_bounds = array<i64: 1, 8, 32>}]} {
    %c0_i32 = arith.constant 0 : i32
    %0 = arith.cmpi eq, %arg1, %c0_i32 : i32
    %1 = arith.extui %0 : i1 to i32
    %c0_i32_0 = arith.constant 0 : i32
    %2 = arith.cmpi ne, %1, %c0_i32_0 : i32
    scf.if %2 {
      %c0_88 = arith.constant 0 : index
      %c0_89 = arith.constant 0 : index
      %c0_90 = arith.constant 0 : index
      %165 = vector.load %arg3[%c0_88, %c0_89, %c0_90] : memref<1x8x32xbf16, #tpu.memory_space<vmem>>, vector<1x8x32xbf16>
      %166 = vector.shape_cast %165 : vector<1x8x32xbf16> to vector<8x32xbf16>
      %167 = arith.extf %166 : vector<8x32xbf16> to vector<8x32xf32>
      %cst_91 = arith.constant dense<0.000000e+00> : vector<8xf32>
      %168 = vector.multi_reduction <add>, %167, %cst_91 [1] : vector<8x32xf32> to vector<8xf32>
      %169 = vector.shape_cast %168 : vector<8xf32> to vector<8x1xf32>
      %cst_92 = arith.constant 3.200000e+01 : f32
      %170 = vector.broadcast %cst_92 : f32 to vector<8x1xf32>
      %171 = arith.divf %169, %170 : vector<8x1xf32>
      %172 = vector.broadcast %171 : vector<8x1xf32> to vector<8x32xf32>
      %173 = arith.subf %167, %172 : vector<8x32xf32>
      %174 = arith.mulf %173, %173 : vector<8x32xf32>
      %cst_93 = arith.constant dense<0.000000e+00> : vector<8xf32>
      %175 = vector.multi_reduction <add>, %174, %cst_93 [1] : vector<8x32xf32> to vector<8xf32>
      %176 = vector.shape_cast %175 : vector<8xf32> to vector<8x1xf32>
      %cst_94 = arith.constant 0.0322580636 : f32
      %177 = vector.broadcast %cst_94 : f32 to vector<8x1xf32>
      %178 = arith.mulf %176, %177 : vector<8x1xf32>
      %179 = math.sqrt %178 : vector<8x1xf32>
      %cst_95 = arith.constant 9.99999997E-7 : f32
      %180 = vector.broadcast %cst_95 : f32 to vector<8x1xf32>
      %181 = arith.addf %179, %180 : vector<8x1xf32>
      %182 = tpu.reciprocal %181 {approx = true} : vector<8x1xf32> -> vector<8x1xf32>
      %183 = vector.broadcast %182 : vector<8x1xf32> to vector<8x32xf32>
      %184 = arith.mulf %173, %183 : vector<8x32xf32>
      %185 = arith.truncf %184 : vector<8x32xf32> to vector<8x32xbf16>
      %c0_96 = arith.constant 0 : index
      %c0_97 = arith.constant 0 : index
      %186 = vector.load %arg7[%c0_96, %c0_97] : memref<32x32xbf16, #tpu.memory_space<vmem>>, vector<32x32xbf16>
      %cst_98 = arith.constant dense<0.000000e+00> : vector<8x32xf32>
      %187 = tpu.matmul %185, %186, %cst_98 {dimension_numbers = #tpu.dot_dimension_numbers<[1], [0], [0], [1], [0, 0, 1, 1], [], []>} : vector<8x32xbf16>, vector<32x32xbf16>, vector<8x32xf32> -> vector<8x32xf32>
      %c0_99 = arith.constant 0 : index
      %c0_100 = arith.constant 0 : index
      %188 = vector.load %arg8[%c0_99, %c0_100] : memref<1x32xf32, #tpu.memory_space<vmem>>, vector<1x32xf32>
      %189 = vector.broadcast %188 : vector<1x32xf32> to vector<8x32xf32>
      %190 = arith.addf %187, %189 : vector<8x32xf32>
      %191 = arith.truncf %190 : vector<8x32xf32> to vector<8x32xbf16>
      %192 = vector.extract_strided_slice %191 {offsets = [0, 0], sizes = [8, 8], strides = [1, 1]} : vector<8x32xbf16> to vector<8x8xbf16>
      %c0_101 = arith.constant 0 : index
      %c0_102 = arith.constant 0 : index
      %c0_103 = arith.constant 0 : index
      %193 = vector.load %arg18[%c0_101, %c0_102, %c0_103] : memref<4x8x8xbf16, #tpu.memory_space<vmem>>, vector<1x8x8xbf16>
      %194 = vector.shape_cast %193 : vector<1x8x8xbf16> to vector<8x8xbf16>
      %195 = vector.shape_cast %192 : vector<8x8xbf16> to vector<1x8x8xbf16>
      tpu.vector_store %arg18[%c0_101, %c0_102, %c0_103], %195 {strides = array<i32>} : memref<4x8x8xbf16, #tpu.memory_space<vmem>>, vector<1x8x8xbf16>,
      %196 = vector.extract_strided_slice %191 {offsets = [0, 8], sizes = [8, 8], strides = [1, 1]} : vector<8x32xbf16> to vector<8x8xbf16>
      %c1_104 = arith.constant 1 : index
      %c0_105 = arith.constant 0 : index
      %c0_106 = arith.constant 0 : index
      %197 = vector.load %arg18[%c1_104, %c0_105, %c0_106] : memref<4x8x8xbf16, #tpu.memory_space<vmem>>, vector<1x8x8xbf16>
      %198 = vector.shape_cast %197 : vector<1x8x8xbf16> to vector<8x8xbf16>
      %199 = vector.shape_cast %196 : vector<8x8xbf16> to vector<1x8x8xbf16>
      tpu.vector_store %arg18[%c1_104, %c0_105, %c0_106], %199 {strides = array<i32>} : memref<4x8x8xbf16, #tpu.memory_space<vmem>>, vector<1x8x8xbf16>,
      %200 = vector.extract_strided_slice %191 {offsets = [0, 16], sizes = [8, 8], strides = [1, 1]} : vector<8x32xbf16> to vector<8x8xbf16>
      %c2_107 = arith.constant 2 : index
      %c0_108 = arith.constant 0 : index
      %c0_109 = arith.constant 0 : index
      %201 = vector.load %arg18[%c2_107, %c0_108, %c0_109] : memref<4x8x8xbf16, #tpu.memory_space<vmem>>, vector<1x8x8xbf16>
      %202 = vector.shape_cast %201 : vector<1x8x8xbf16> to vector<8x8xbf16>
      %203 = vector.shape_cast %200 : vector<8x8xbf16> to vector<1x8x8xbf16>
      tpu.vector_store %arg18[%c2_107, %c0_108, %c0_109], %203 {strides = array<i32>} : memref<4x8x8xbf16, #tpu.memory_space<vmem>>, vector<1x8x8xbf16>,
      %204 = vector.extract_strided_slice %191 {offsets = [0, 24], sizes = [8, 8], strides = [1, 1]} : vector<8x32xbf16> to vector<8x8xbf16>
      %c3_110 = arith.constant 3 : index
      %c0_111 = arith.constant 0 : index
      %c0_112 = arith.constant 0 : index
      %205 = vector.load %arg18[%c3_110, %c0_111, %c0_112] : memref<4x8x8xbf16, #tpu.memory_space<vmem>>, vector<1x8x8xbf16>
      %206 = vector.shape_cast %205 : vector<1x8x8xbf16> to vector<8x8xbf16>
      %207 = vector.shape_cast %204 : vector<8x8xbf16> to vector<1x8x8xbf16>
      tpu.vector_store %arg18[%c3_110, %c0_111, %c0_112], %207 {strides = array<i32>} : memref<4x8x8xbf16, #tpu.memory_space<vmem>>, vector<1x8x8xbf16>,
      %c0_113 = arith.constant 0 : index
      %c0_114 = arith.constant 0 : index
      %208 = vector.load %arg9[%c0_113, %c0_114] : memref<32x32xbf16, #tpu.memory_space<vmem>>, vector<32x32xbf16>
      %cst_115 = arith.constant dense<0.000000e+00> : vector<8x32xf32>
      %209 = tpu.matmul %185, %208, %cst_115 {dimension_numbers = #tpu.dot_dimension_numbers<[1], [0], [0], [1], [0, 0, 1, 1], [], []>} : vector<8x32xbf16>, vector<32x32xbf16>, vector<8x32xf32> -> vector<8x32xf32>
      %c0_116 = arith.constant 0 : index
      %c0_117 = arith.constant 0 : index
      %210 = vector.load %arg10[%c0_116, %c0_117] : memref<1x32xf32, #tpu.memory_space<vmem>>, vector<1x32xf32>
      %211 = vector.broadcast %210 : vector<1x32xf32> to vector<8x32xf32>
      %212 = arith.addf %209, %211 : vector<8x32xf32>
      %213 = arith.truncf %212 : vector<8x32xf32> to vector<8x32xbf16>
      %214 = vector.extract_strided_slice %213 {offsets = [0, 0], sizes = [8, 8], strides = [1, 1]} : vector<8x32xbf16> to vector<8x8xbf16>
      %c0_118 = arith.constant 0 : index
      %c0_119 = arith.constant 0 : index
      %c0_120 = arith.constant 0 : index
      %215 = vector.load %arg19[%c0_118, %c0_119, %c0_120] : memref<4x8x8xbf16, #tpu.memory_space<vmem>>, vector<1x8x8xbf16>
      %216 = vector.shape_cast %215 : vector<1x8x8xbf16> to vector<8x8xbf16>
      %217 = vector.shape_cast %214 : vector<8x8xbf16> to vector<1x8x8xbf16>
      tpu.vector_store %arg19[%c0_118, %c0_119, %c0_120], %217 {strides = array<i32>} : memref<4x8x8xbf16, #tpu.memory_space<vmem>>, vector<1x8x8xbf16>,
      %218 = vector.extract_strided_slice %213 {offsets = [0, 8], sizes = [8, 8], strides = [1, 1]} : vector<8x32xbf16> to vector<8x8xbf16>
      %c1_121 = arith.constant 1 : index
      %c0_122 = arith.constant 0 : index
      %c0_123 = arith.constant 0 : index
      %219 = vector.load %arg19[%c1_121, %c0_122, %c0_123] : memref<4x8x8xbf16, #tpu.memory_space<vmem>>, vector<1x8x8xbf16>
      %220 = vector.shape_cast %219 : vector<1x8x8xbf16> to vector<8x8xbf16>
      %221 = vector.shape_cast %218 : vector<8x8xbf16> to vector<1x8x8xbf16>
      tpu.vector_store %arg19[%c1_121, %c0_122, %c0_123], %221 {strides = array<i32>} : memref<4x8x8xbf16, #tpu.memory_space<vmem>>, vector<1x8x8xbf16>,
      %222 = vector.extract_strided_slice %213 {offsets = [0, 16], sizes = [8, 8], strides = [1, 1]} : vector<8x32xbf16> to vector<8x8xbf16>
      %c2_124 = arith.constant 2 : index
      %c0_125 = arith.constant 0 : index
      %c0_126 = arith.constant 0 : index
      %223 = vector.load %arg19[%c2_124, %c0_125, %c0_126] : memref<4x8x8xbf16, #tpu.memory_space<vmem>>, vector<1x8x8xbf16>
      %224 = vector.shape_cast %223 : vector<1x8x8xbf16> to vector<8x8xbf16>
      %225 = vector.shape_cast %222 : vector<8x8xbf16> to vector<1x8x8xbf16>
      tpu.vector_store %arg19[%c2_124, %c0_125, %c0_126], %225 {strides = array<i32>} : memref<4x8x8xbf16, #tpu.memory_space<vmem>>, vector<1x8x8xbf16>,
      %226 = vector.extract_strided_slice %213 {offsets = [0, 24], sizes = [8, 8], strides = [1, 1]} : vector<8x32xbf16> to vector<8x8xbf16>
      %c3_127 = arith.constant 3 : index
      %c0_128 = arith.constant 0 : index
      %c0_129 = arith.constant 0 : index
      %227 = vector.load %arg19[%c3_127, %c0_128, %c0_129] : memref<4x8x8xbf16, #tpu.memory_space<vmem>>, vector<1x8x8xbf16>
      %228 = vector.shape_cast %227 : vector<1x8x8xbf16> to vector<8x8xbf16>
      %229 = vector.shape_cast %226 : vector<8x8xbf16> to vector<1x8x8xbf16>
      tpu.vector_store %arg19[%c3_127, %c0_128, %c0_129], %229 {strides = array<i32>} : memref<4x8x8xbf16, #tpu.memory_space<vmem>>, vector<1x8x8xbf16>,
    } else {
    }
    %c0 = arith.constant 0 : index
    %c0_1 = arith.constant 0 : index
    %c0_2 = arith.constant 0 : index
    %3 = vector.load %arg2[%c0, %c0_1, %c0_2] : memref<1x8x32xf32, #tpu.memory_space<vmem>>, vector<1x8x32xf32>
    %4 = vector.shape_cast %3 : vector<1x8x32xf32> to vector<8x32xf32>
    %c0_3 = arith.constant 0 : index
    %c0_4 = arith.constant 0 : index
    %c0_5 = arith.constant 0 : index
    %5 = vector.load %arg4[%c0_3, %c0_4, %c0_5] : memref<1x1x8xf32, #tpu.memory_space<vmem>>, vector<1x1x8xf32>
    %6 = vector.shape_cast %5 : vector<1x1x8xf32> to vector<1x8xf32>
    %7 = vector.shape_cast %6 : vector<1x8xf32> to vector<1x8xf32>
    %8 = vector.broadcast %7 : vector<1x8xf32> to vector<8x8xf32>
    %cst = arith.constant 0.000000e+00 : f32
    %9 = vector.broadcast %cst : f32 to vector<8x8xf32>
    %10 = arith.cmpf oeq, %8, %9 : vector<8x8xf32>
    %cst_6 = arith.constant dense<0.000000e+00> : vector<8xf32>
    %11 = vector.multi_reduction <add>, %4, %cst_6 [1] : vector<8x32xf32> to vector<8xf32>
    %12 = vector.shape_cast %11 : vector<8xf32> to vector<8x1xf32>
    %cst_7 = arith.constant 3.200000e+01 : f32
    %13 = vector.broadcast %cst_7 : f32 to vector<8x1xf32>
    %14 = arith.divf %12, %13 : vector<8x1xf32>
    %15 = vector.broadcast %14 : vector<8x1xf32> to vector<8x32xf32>
    %16 = arith.subf %4, %15 : vector<8x32xf32>
    %17 = arith.mulf %16, %16 : vector<8x32xf32>
    %cst_8 = arith.constant dense<0.000000e+00> : vector<8xf32>
    %18 = vector.multi_reduction <add>, %17, %cst_8 [1] : vector<8x32xf32> to vector<8xf32>
    %19 = vector.shape_cast %18 : vector<8xf32> to vector<8x1xf32>
    %cst_9 = arith.constant 0.0322580636 : f32
    %20 = vector.broadcast %cst_9 : f32 to vector<8x1xf32>
    %21 = arith.mulf %19, %20 : vector<8x1xf32>
    %22 = math.sqrt %21 : vector<8x1xf32>
    %cst_10 = arith.constant 9.99999997E-7 : f32
    %23 = vector.broadcast %cst_10 : f32 to vector<8x1xf32>
    %24 = arith.addf %22, %23 : vector<8x1xf32>
    %25 = tpu.reciprocal %24 {approx = true} : vector<8x1xf32> -> vector<8x1xf32>
    %26 = vector.broadcast %25 : vector<8x1xf32> to vector<8x32xf32>
    %27 = arith.mulf %16, %26 : vector<8x32xf32>
    %28 = arith.truncf %27 : vector<8x32xf32> to vector<8x32xbf16>
    %c0_11 = arith.constant 0 : index
    %c0_12 = arith.constant 0 : index
    %29 = vector.load %arg5[%c0_11, %c0_12] : memref<32x32xbf16, #tpu.memory_space<vmem>>, vector<32x32xbf16>
    %cst_13 = arith.constant dense<0.000000e+00> : vector<8x32xf32>
    %30 = tpu.matmul %28, %29, %cst_13 {dimension_numbers = #tpu.dot_dimension_numbers<[1], [0], [0], [1], [0, 0, 1, 1], [], []>} : vector<8x32xbf16>, vector<32x32xbf16>, vector<8x32xf32> -> vector<8x32xf32>
    %c0_14 = arith.constant 0 : index
    %c0_15 = arith.constant 0 : index
    %31 = vector.load %arg6[%c0_14, %c0_15] : memref<1x32xf32, #tpu.memory_space<vmem>>, vector<1x32xf32>
    %32 = vector.broadcast %31 : vector<1x32xf32> to vector<8x32xf32>
    %33 = arith.addf %30, %32 : vector<8x32xf32>
    %34 = arith.truncf %33 : vector<8x32xf32> to vector<8x32xbf16>
    %35 = vector.extract_strided_slice %34 {offsets = [0, 0], sizes = [8, 8], strides = [1, 1]} : vector<8x32xbf16> to vector<8x8xbf16>
    %c0_16 = arith.constant 0 : index
    %c0_17 = arith.constant 0 : index
    %c0_18 = arith.constant 0 : index
    %36 = vector.load %arg18[%c0_16, %c0_17, %c0_18] : memref<4x8x8xbf16, #tpu.memory_space<vmem>>, vector<1x8x8xbf16>
    %37 = vector.shape_cast %36 : vector<1x8x8xbf16> to vector<8x8xbf16>
    %c0_19 = arith.constant 0 : index
    %c0_20 = arith.constant 0 : index
    %c0_21 = arith.constant 0 : index
    %38 = vector.load %arg19[%c0_19, %c0_20, %c0_21] : memref<4x8x8xbf16, #tpu.memory_space<vmem>>, vector<1x8x8xbf16>
    %39 = vector.shape_cast %38 : vector<1x8x8xbf16> to vector<8x8xbf16>
    %cst_22 = arith.constant dense<0.000000e+00> : vector<8x8xf32>
    %40 = tpu.matmul %35, %37, %cst_22 {dimension_numbers = #tpu.dot_dimension_numbers<[1], [1], [0], [0], [0, 0, 1, 0], [], []>} : vector<8x8xbf16>, vector<8x8xbf16>, vector<8x8xf32> -> vector<8x8xf32>
    %cst_23 = arith.constant -1.000000e+09 : f32
    %41 = vector.broadcast %cst_23 : f32 to vector<8x8xf32>
    %42 = arith.select %10, %41, %40 : vector<8x8xi1>, vector<8x8xf32>
    %cst_24 = arith.constant dense<0xFF800000> : vector<8xf32>
    %43 = vector.multi_reduction <maximumf>, %42, %cst_24 [1] : vector<8x8xf32> to vector<8xf32>
    %44 = vector.shape_cast %43 : vector<8xf32> to vector<8x1xf32>
    %45 = vector.broadcast %44 : vector<8x1xf32> to vector<8x8xf32>
    %46 = arith.subf %42, %45 : vector<8x8xf32>
    %47 = math.exp %46 : vector<8x8xf32>
    %cst_25 = arith.constant dense<0.000000e+00> : vector<8xf32>
    %48 = vector.multi_reduction <add>, %47, %cst_25 [1] : vector<8x8xf32> to vector<8xf32>
    %49 = vector.shape_cast %48 : vector<8xf32> to vector<8x1xf32>
    %50 = arith.truncf %47 : vector<8x8xf32> to vector<8x8xbf16>
    %51 = tpu.reciprocal %49 {approx = true} : vector<8x1xf32> -> vector<8x1xf32>
    %cst_26 = arith.constant dense<0.000000e+00> : vector<8x8xf32>
    %52 = tpu.matmul %50, %39, %cst_26 {dimension_numbers = #tpu.dot_dimension_numbers<[1], [0], [0], [1], [0, 0, 1, 1], [], []>} : vector<8x8xbf16>, vector<8x8xbf16>, vector<8x8xf32> -> vector<8x8xf32>
    %53 = vector.broadcast %51 : vector<8x1xf32> to vector<8x8xf32>
    %54 = arith.mulf %52, %53 : vector<8x8xf32>
    %55 = arith.truncf %54 : vector<8x8xf32> to vector<8x8xbf16>
    %c0_27 = arith.constant 0 : index
    %c0_28 = arith.constant 0 : index
    %56 = vector.load %arg20[%c0_27, %c0_28] : memref<8x32xbf16, #tpu.memory_space<vmem>>, vector<8x8xbf16>
    tpu.vector_store %arg20[%c0_27, %c0_28], %55 {strides = array<i32>} : memref<8x32xbf16, #tpu.memory_space<vmem>>, vector<8x8xbf16>,
    %57 = vector.extract_strided_slice %34 {offsets = [0, 8], sizes = [8, 8], strides = [1, 1]} : vector<8x32xbf16> to vector<8x8xbf16>
    %c1 = arith.constant 1 : index
    %c0_29 = arith.constant 0 : index
    %c0_30 = arith.constant 0 : index
    %58 = vector.load %arg18[%c1, %c0_29, %c0_30] : memref<4x8x8xbf16, #tpu.memory_space<vmem>>, vector<1x8x8xbf16>
    %59 = vector.shape_cast %58 : vector<1x8x8xbf16> to vector<8x8xbf16>
    %c1_31 = arith.constant 1 : index
    %c0_32 = arith.constant 0 : index
    %c0_33 = arith.constant 0 : index
    %60 = vector.load %arg19[%c1_31, %c0_32, %c0_33] : memref<4x8x8xbf16, #tpu.memory_space<vmem>>, vector<1x8x8xbf16>
    %61 = vector.shape_cast %60 : vector<1x8x8xbf16> to vector<8x8xbf16>
    %cst_34 = arith.constant dense<0.000000e+00> : vector<8x8xf32>
    %62 = tpu.matmul %57, %59, %cst_34 {dimension_numbers = #tpu.dot_dimension_numbers<[1], [1], [0], [0], [0, 0, 1, 0], [], []>} : vector<8x8xbf16>, vector<8x8xbf16>, vector<8x8xf32> -> vector<8x8xf32>
    %cst_35 = arith.constant -1.000000e+09 : f32
    %63 = vector.broadcast %cst_35 : f32 to vector<8x8xf32>
    %64 = arith.select %10, %63, %62 : vector<8x8xi1>, vector<8x8xf32>
    %cst_36 = arith.constant dense<0xFF800000> : vector<8xf32>
    %65 = vector.multi_reduction <maximumf>, %64, %cst_36 [1] : vector<8x8xf32> to vector<8xf32>
    %66 = vector.shape_cast %65 : vector<8xf32> to vector<8x1xf32>
    %67 = vector.broadcast %66 : vector<8x1xf32> to vector<8x8xf32>
    %68 = arith.subf %64, %67 : vector<8x8xf32>
    %69 = math.exp %68 : vector<8x8xf32>
    %cst_37 = arith.constant dense<0.000000e+00> : vector<8xf32>
    %70 = vector.multi_reduction <add>, %69, %cst_37 [1] : vector<8x8xf32> to vector<8xf32>
    %71 = vector.shape_cast %70 : vector<8xf32> to vector<8x1xf32>
    %72 = arith.truncf %69 : vector<8x8xf32> to vector<8x8xbf16>
    %73 = tpu.reciprocal %71 {approx = true} : vector<8x1xf32> -> vector<8x1xf32>
    %cst_38 = arith.constant dense<0.000000e+00> : vector<8x8xf32>
    %74 = tpu.matmul %72, %61, %cst_38 {dimension_numbers = #tpu.dot_dimension_numbers<[1], [0], [0], [1], [0, 0, 1, 1], [], []>} : vector<8x8xbf16>, vector<8x8xbf16>, vector<8x8xf32> -> vector<8x8xf32>
    %75 = vector.broadcast %73 : vector<8x1xf32> to vector<8x8xf32>
    %76 = arith.mulf %74, %75 : vector<8x8xf32>
    %77 = arith.truncf %76 : vector<8x8xf32> to vector<8x8xbf16>
    %c0_39 = arith.constant 0 : index
    %c8 = arith.constant 8 : index
    %78 = vector.load %arg20[%c0_39, %c8] : memref<8x32xbf16, #tpu.memory_space<vmem>>, vector<8x8xbf16>
    tpu.vector_store %arg20[%c0_39, %c8], %77 {strides = array<i32>} : memref<8x32xbf16, #tpu.memory_space<vmem>>, vector<8x8xbf16>,
    %79 = vector.extract_strided_slice %34 {offsets = [0, 16], sizes = [8, 8], strides = [1, 1]} : vector<8x32xbf16> to vector<8x8xbf16>
    %c2 = arith.constant 2 : index
    %c0_40 = arith.constant 0 : index
    %c0_41 = arith.constant 0 : index
    %80 = vector.load %arg18[%c2, %c0_40, %c0_41] : memref<4x8x8xbf16, #tpu.memory_space<vmem>>, vector<1x8x8xbf16>
    %81 = vector.shape_cast %80 : vector<1x8x8xbf16> to vector<8x8xbf16>
    %c2_42 = arith.constant 2 : index
    %c0_43 = arith.constant 0 : index
    %c0_44 = arith.constant 0 : index
    %82 = vector.load %arg19[%c2_42, %c0_43, %c0_44] : memref<4x8x8xbf16, #tpu.memory_space<vmem>>, vector<1x8x8xbf16>
    %83 = vector.shape_cast %82 : vector<1x8x8xbf16> to vector<8x8xbf16>
    %cst_45 = arith.constant dense<0.000000e+00> : vector<8x8xf32>
    %84 = tpu.matmul %79, %81, %cst_45 {dimension_numbers = #tpu.dot_dimension_numbers<[1], [1], [0], [0], [0, 0, 1, 0], [], []>} : vector<8x8xbf16>, vector<8x8xbf16>, vector<8x8xf32> -> vector<8x8xf32>
    %cst_46 = arith.constant -1.000000e+09 : f32
    %85 = vector.broadcast %cst_46 : f32 to vector<8x8xf32>
    %86 = arith.select %10, %85, %84 : vector<8x8xi1>, vector<8x8xf32>
    %cst_47 = arith.constant dense<0xFF800000> : vector<8xf32>
    %87 = vector.multi_reduction <maximumf>, %86, %cst_47 [1] : vector<8x8xf32> to vector<8xf32>
    %88 = vector.shape_cast %87 : vector<8xf32> to vector<8x1xf32>
    %89 = vector.broadcast %88 : vector<8x1xf32> to vector<8x8xf32>
    %90 = arith.subf %86, %89 : vector<8x8xf32>
    %91 = math.exp %90 : vector<8x8xf32>
    %cst_48 = arith.constant dense<0.000000e+00> : vector<8xf32>
    %92 = vector.multi_reduction <add>, %91, %cst_48 [1] : vector<8x8xf32> to vector<8xf32>
    %93 = vector.shape_cast %92 : vector<8xf32> to vector<8x1xf32>
    %94 = arith.truncf %91 : vector<8x8xf32> to vector<8x8xbf16>
    %95 = tpu.reciprocal %93 {approx = true} : vector<8x1xf32> -> vector<8x1xf32>
    %cst_49 = arith.constant dense<0.000000e+00> : vector<8x8xf32>
    %96 = tpu.matmul %94, %83, %cst_49 {dimension_numbers = #tpu.dot_dimension_numbers<[1], [0], [0], [1], [0, 0, 1, 1], [], []>} : vector<8x8xbf16>, vector<8x8xbf16>, vector<8x8xf32> -> vector<8x8xf32>
    %97 = vector.broadcast %95 : vector<8x1xf32> to vector<8x8xf32>
    %98 = arith.mulf %96, %97 : vector<8x8xf32>
    %99 = arith.truncf %98 : vector<8x8xf32> to vector<8x8xbf16>
    %c0_50 = arith.constant 0 : index
    %c16 = arith.constant 16 : index
    %100 = vector.load %arg20[%c0_50, %c16] : memref<8x32xbf16, #tpu.memory_space<vmem>>, vector<8x8xbf16>
    tpu.vector_store %arg20[%c0_50, %c16], %99 {strides = array<i32>} : memref<8x32xbf16, #tpu.memory_space<vmem>>, vector<8x8xbf16>,
    %101 = vector.extract_strided_slice %34 {offsets = [0, 24], sizes = [8, 8], strides = [1, 1]} : vector<8x32xbf16> to vector<8x8xbf16>
    %c3 = arith.constant 3 : index
    %c0_51 = arith.constant 0 : index
    %c0_52 = arith.constant 0 : index
    %102 = vector.load %arg18[%c3, %c0_51, %c0_52] : memref<4x8x8xbf16, #tpu.memory_space<vmem>>, vector<1x8x8xbf16>
    %103 = vector.shape_cast %102 : vector<1x8x8xbf16> to vector<8x8xbf16>
    %c3_53 = arith.constant 3 : index
    %c0_54 = arith.constant 0 : index
    %c0_55 = arith.constant 0 : index
    %104 = vector.load %arg19[%c3_53, %c0_54, %c0_55] : memref<4x8x8xbf16, #tpu.memory_space<vmem>>, vector<1x8x8xbf16>
    %105 = vector.shape_cast %104 : vector<1x8x8xbf16> to vector<8x8xbf16>
    %cst_56 = arith.constant dense<0.000000e+00> : vector<8x8xf32>
    %106 = tpu.matmul %101, %103, %cst_56 {dimension_numbers = #tpu.dot_dimension_numbers<[1], [1], [0], [0], [0, 0, 1, 0], [], []>} : vector<8x8xbf16>, vector<8x8xbf16>, vector<8x8xf32> -> vector<8x8xf32>
    %cst_57 = arith.constant -1.000000e+09 : f32
    %107 = vector.broadcast %cst_57 : f32 to vector<8x8xf32>
    %108 = arith.select %10, %107, %106 : vector<8x8xi1>, vector<8x8xf32>
    %cst_58 = arith.constant dense<0xFF800000> : vector<8xf32>
    %109 = vector.multi_reduction <maximumf>, %108, %cst_58 [1] : vector<8x8xf32> to vector<8xf32>
    %110 = vector.shape_cast %109 : vector<8xf32> to vector<8x1xf32>
    %111 = vector.broadcast %110 : vector<8x1xf32> to vector<8x8xf32>
    %112 = arith.subf %108, %111 : vector<8x8xf32>
    %113 = math.exp %112 : vector<8x8xf32>
    %cst_59 = arith.constant dense<0.000000e+00> : vector<8xf32>
    %114 = vector.multi_reduction <add>, %113, %cst_59 [1] : vector<8x8xf32> to vector<8xf32>
    %115 = vector.shape_cast %114 : vector<8xf32> to vector<8x1xf32>
    %116 = arith.truncf %113 : vector<8x8xf32> to vector<8x8xbf16>
    %117 = tpu.reciprocal %115 {approx = true} : vector<8x1xf32> -> vector<8x1xf32>
    %cst_60 = arith.constant dense<0.000000e+00> : vector<8x8xf32>
    %118 = tpu.matmul %116, %105, %cst_60 {dimension_numbers = #tpu.dot_dimension_numbers<[1], [0], [0], [1], [0, 0, 1, 1], [], []>} : vector<8x8xbf16>, vector<8x8xbf16>, vector<8x8xf32> -> vector<8x8xf32>
    %119 = vector.broadcast %117 : vector<8x1xf32> to vector<8x8xf32>
    %120 = arith.mulf %118, %119 : vector<8x8xf32>
    %121 = arith.truncf %120 : vector<8x8xf32> to vector<8x8xbf16>
    %c0_61 = arith.constant 0 : index
    %c24 = arith.constant 24 : index
    %122 = vector.load %arg20[%c0_61, %c24] : memref<8x32xbf16, #tpu.memory_space<vmem>>, vector<8x8xbf16>
    tpu.vector_store %arg20[%c0_61, %c24], %121 {strides = array<i32>} : memref<8x32xbf16, #tpu.memory_space<vmem>>, vector<8x8xbf16>,
    %c0_62 = arith.constant 0 : index
    %c0_63 = arith.constant 0 : index
    %123 = vector.load %arg20[%c0_62, %c0_63] : memref<8x32xbf16, #tpu.memory_space<vmem>>, vector<8x32xbf16>
    %c0_64 = arith.constant 0 : index
    %c0_65 = arith.constant 0 : index
    %124 = vector.load %arg11[%c0_64, %c0_65] : memref<32x32xbf16, #tpu.memory_space<vmem>>, vector<32x32xbf16>
    %cst_66 = arith.constant dense<0.000000e+00> : vector<8x32xf32>
    %125 = tpu.matmul %123, %124, %cst_66 {dimension_numbers = #tpu.dot_dimension_numbers<[1], [0], [0], [1], [0, 0, 1, 1], [], []>} : vector<8x32xbf16>, vector<32x32xbf16>, vector<8x32xf32> -> vector<8x32xf32>
    %c0_67 = arith.constant 0 : index
    %c0_68 = arith.constant 0 : index
    %126 = vector.load %arg12[%c0_67, %c0_68] : memref<1x32xf32, #tpu.memory_space<vmem>>, vector<1x32xf32>
    %127 = vector.broadcast %126 : vector<1x32xf32> to vector<8x32xf32>
    %128 = arith.addf %125, %127 : vector<8x32xf32>
    %129 = arith.addf %4, %128 : vector<8x32xf32>
    %cst_69 = arith.constant dense<0.000000e+00> : vector<8xf32>
    %130 = vector.multi_reduction <add>, %129, %cst_69 [1] : vector<8x32xf32> to vector<8xf32>
    %131 = vector.shape_cast %130 : vector<8xf32> to vector<8x1xf32>
    %cst_70 = arith.constant 3.200000e+01 : f32
    %132 = vector.broadcast %cst_70 : f32 to vector<8x1xf32>
    %133 = arith.divf %131, %132 : vector<8x1xf32>
    %134 = vector.broadcast %133 : vector<8x1xf32> to vector<8x32xf32>
    %135 = arith.subf %129, %134 : vector<8x32xf32>
    %136 = arith.mulf %135, %135 : vector<8x32xf32>
    %cst_71 = arith.constant dense<0.000000e+00> : vector<8xf32>
    %137 = vector.multi_reduction <add>, %136, %cst_71 [1] : vector<8x32xf32> to vector<8xf32>
    %138 = vector.shape_cast %137 : vector<8xf32> to vector<8x1xf32>
    %cst_72 = arith.constant 0.0322580636 : f32
    %139 = vector.broadcast %cst_72 : f32 to vector<8x1xf32>
    %140 = arith.mulf %138, %139 : vector<8x1xf32>
    %141 = math.sqrt %140 : vector<8x1xf32>
    %cst_73 = arith.constant 9.99999997E-7 : f32
    %142 = vector.broadcast %cst_73 : f32 to vector<8x1xf32>
    %143 = arith.addf %141, %142 : vector<8x1xf32>
    %144 = tpu.reciprocal %143 {approx = true} : vector<8x1xf32> -> vector<8x1xf32>
    %145 = vector.broadcast %144 : vector<8x1xf32> to vector<8x32xf32>
    %146 = arith.mulf %135, %145 : vector<8x32xf32>
    %147 = arith.truncf %146 : vector<8x32xf32> to vector<8x32xbf16>
    %c0_74 = arith.constant 0 : index
    %c0_75 = arith.constant 0 : index
    %148 = vector.load %arg13[%c0_74, %c0_75] : memref<32x64xbf16, #tpu.memory_space<vmem>>, vector<32x64xbf16>
    %cst_76 = arith.constant dense<0.000000e+00> : vector<8x64xf32>
    %149 = tpu.matmul %147, %148, %cst_76 {dimension_numbers = #tpu.dot_dimension_numbers<[1], [0], [0], [1], [0, 0, 1, 1], [], []>} : vector<8x32xbf16>, vector<32x64xbf16>, vector<8x64xf32> -> vector<8x64xf32>
    %c0_77 = arith.constant 0 : index
    %c0_78 = arith.constant 0 : index
    %150 = vector.load %arg14[%c0_77, %c0_78] : memref<1x64xf32, #tpu.memory_space<vmem>>, vector<1x64xf32>
    %151 = vector.broadcast %150 : vector<1x64xf32> to vector<8x64xf32>
    %152 = arith.addf %149, %151 : vector<8x64xf32>
    %cst_79 = arith.constant 0.000000e+00 : f32
    %153 = vector.broadcast %cst_79 : f32 to vector<8x64xf32>
    %154 = arith.maximumf %152, %153 : vector<8x64xf32>
    %155 = arith.truncf %154 : vector<8x64xf32> to vector<8x64xbf16>
    %c0_80 = arith.constant 0 : index
    %c0_81 = arith.constant 0 : index
    %156 = vector.load %arg15[%c0_80, %c0_81] : memref<64x32xbf16, #tpu.memory_space<vmem>>, vector<64x32xbf16>
    %cst_82 = arith.constant dense<0.000000e+00> : vector<8x32xf32>
    %157 = tpu.matmul %155, %156, %cst_82 {dimension_numbers = #tpu.dot_dimension_numbers<[1], [0], [0], [1], [0, 0, 1, 1], [], []>} : vector<8x64xbf16>, vector<64x32xbf16>, vector<8x32xf32> -> vector<8x32xf32>
    %c0_83 = arith.constant 0 : index
    %c0_84 = arith.constant 0 : index
    %158 = vector.load %arg16[%c0_83, %c0_84] : memref<1x32xf32, #tpu.memory_space<vmem>>, vector<1x32xf32>
    %159 = vector.broadcast %158 : vector<1x32xf32> to vector<8x32xf32>
    %160 = arith.addf %157, %159 : vector<8x32xf32>
    %161 = arith.addf %129, %160 : vector<8x32xf32>
    %c0_85 = arith.constant 0 : index
    %c0_86 = arith.constant 0 : index
    %c0_87 = arith.constant 0 : index
    %162 = vector.load %arg17[%c0_85, %c0_86, %c0_87] : memref<1x8x32xf32, #tpu.memory_space<vmem>>, vector<1x8x32xf32>
    %163 = vector.shape_cast %162 : vector<1x8x32xf32> to vector<8x32xf32>
    %164 = vector.shape_cast %161 : vector<8x32xf32> to vector<1x8x32xf32>
    tpu.vector_store %arg17[%c0_85, %c0_86, %c0_87], %164 {strides = array<i32>} : memref<1x8x32xf32, #tpu.memory_space<vmem>>, vector<1x8x32xf32>,
    return
  }
  func.func @transform_0(%arg0: i32, %arg1: i32) -> (i32, i32, i32) {
    %c0_i32 = arith.constant 0 : i32
    %c0_i32_0 = arith.constant 0 : i32
    return %arg0, %arg1, %c0_i32 : i32, i32, i32
  }
  func.func @transform_1(%arg0: i32, %arg1: i32) -> (i32, i32, i32) {
    %c0_i32 = arith.constant 0 : i32
    %c0_i32_0 = arith.constant 0 : i32
    %c0_i32_1 = arith.constant 0 : i32
    return %arg0, %c0_i32, %c0_i32_0 : i32, i32, i32
  }
  func.func @transform_2(%arg0: i32, %arg1: i32) -> (i32, i32, i32) {
    %c0_i32 = arith.constant 0 : i32
    %c0_i32_0 = arith.constant 0 : i32
    %c0_i32_1 = arith.constant 0 : i32
    return %arg0, %c0_i32, %c0_i32_0 : i32, i32, i32
  }
  func.func @transform_3(%arg0: i32, %arg1: i32) -> (i32, i32) {
    %c0_i32 = arith.constant 0 : i32
    %c0_i32_0 = arith.constant 0 : i32
    %c0_i32_1 = arith.constant 0 : i32
    return %c0_i32, %c0_i32_0 : i32, i32
  }
  func.func @transform_4(%arg0: i32, %arg1: i32) -> (i32, i32) {
    %c0_i32 = arith.constant 0 : i32
    %c0_i32_0 = arith.constant 0 : i32
    %c0_i32_1 = arith.constant 0 : i32
    return %c0_i32, %c0_i32_0 : i32, i32
  }
  func.func @transform_5(%arg0: i32, %arg1: i32) -> (i32, i32) {
    %c0_i32 = arith.constant 0 : i32
    %c0_i32_0 = arith.constant 0 : i32
    %c0_i32_1 = arith.constant 0 : i32
    return %c0_i32, %c0_i32_0 : i32, i32
  }
  func.func @transform_6(%arg0: i32, %arg1: i32) -> (i32, i32) {
    %c0_i32 = arith.constant 0 : i32
    %c0_i32_0 = arith.constant 0 : i32
    %c0_i32_1 = arith.constant 0 : i32
    return %c0_i32, %c0_i32_0 : i32, i32
  }
  func.func @transform_7(%arg0: i32, %arg1: i32) -> (i32, i32) {
    %c0_i32 = arith.constant 0 : i32
    %c0_i32_0 = arith.constant 0 : i32
    %c0_i32_1 = arith.constant 0 : i32
    return %c0_i32, %c0_i32_0 : i32, i32
  }
  func.func @transform_8(%arg0: i32, %arg1: i32) -> (i32, i32) {
    %c0_i32 = arith.constant 0 : i32
    %c0_i32_0 = arith.constant 0 : i32
    %c0_i32_1 = arith.constant 0 : i32
    return %c0_i32, %c0_i32_0 : i32, i32
  }
  func.func @transform_9(%arg0: i32, %arg1: i32) -> (i32, i32) {
    %c0_i32 = arith.constant 0 : i32
    %c0_i32_0 = arith.constant 0 : i32
    %c0_i32_1 = arith.constant 0 : i32
    return %c0_i32, %c0_i32_0 : i32, i32
  }
  func.func @transform_10(%arg0: i32, %arg1: i32) -> (i32, i32) {
    %c0_i32 = arith.constant 0 : i32
    %c0_i32_0 = arith.constant 0 : i32
    %c0_i32_1 = arith.constant 0 : i32
    return %c0_i32, %c0_i32_0 : i32, i32
  }
  func.func @transform_11(%arg0: i32, %arg1: i32) -> (i32, i32) {
    %c0_i32 = arith.constant 0 : i32
    %c0_i32_0 = arith.constant 0 : i32
    %c0_i32_1 = arith.constant 0 : i32
    return %c0_i32, %c0_i32_0 : i32, i32
  }
  func.func @transform_12(%arg0: i32, %arg1: i32) -> (i32, i32) {
    %c0_i32 = arith.constant 0 : i32
    %c0_i32_0 = arith.constant 0 : i32
    %c0_i32_1 = arith.constant 0 : i32
    return %c0_i32, %c0_i32_0 : i32, i32
  }
  func.func @transform_13(%arg0: i32, %arg1: i32) -> (i32, i32) {
    %c0_i32 = arith.constant 0 : i32
    %c0_i32_0 = arith.constant 0 : i32
    %c0_i32_1 = arith.constant 0 : i32
    return %c0_i32, %c0_i32_0 : i32, i32
  }
  func.func @transform_14(%arg0: i32, %arg1: i32) -> (i32, i32) {
    %c0_i32 = arith.constant 0 : i32
    %c0_i32_0 = arith.constant 0 : i32
    %c0_i32_1 = arith.constant 0 : i32
    return %c0_i32, %c0_i32_0 : i32, i32
  }
  func.func @transform_15(%arg0: i32, %arg1: i32) -> (i32, i32, i32) {
    %c0_i32 = arith.constant 0 : i32
    %c0_i32_0 = arith.constant 0 : i32
    return %arg0, %arg1, %c0_i32 : i32, i32, i32
  }
}

</mosaic_0001>

<llo_original>
// kernel: tpu_custom_call.1
$region0: #{tpu_custom_call.1}
  #allocation0 [shape = 'u32[]', space=smem, size = 0x4, offset = 0x4, fixed_abs, tag = 'smem constant byte address 0x4 - core index']
  #allocation1 [shape = 'u32[144,128]{1,0:T(1,128)}', space=vmem, size = 0x12000, scoped, tag = 'internal scratch']
  #allocation2 [shape = 'bf16[4,8,8]{2,1,0:T(8,128)(2,1)}', space=vmem, size = 0x2000, scoped, tag = 'scratch operand']
  #allocation3 [shape = 'bf16[4,8,8]{2,1,0:T(8,128)(2,1)}', space=vmem, size = 0x2000, scoped, tag = 'scratch operand']
  #allocation4 [shape = 'bf16[8,32]{1,0:T(8,128)(2,1)}', space=vmem, size = 0x800, scoped, tag = 'scratch operand']
  %s0 = inlined_call_operand.vmem [shape: f32[2,8,32], index: 0, kind: input, shape index: {}]
  %s1 = inlined_call_operand.hbm [shape: bf16[2,8,32], index: 1, kind: input, shape index: {}]
  %s2 = inlined_call_operand.vmem [shape: f32[2,1,8], index: 2, kind: input, shape index: {}]
  %s3 = inlined_call_operand.vmem [shape: bf16[32,32], index: 3, kind: input, shape index: {}]
  %s4 = inlined_call_operand.hbm [shape: f32[1,32], index: 4, kind: input, shape index: {}]
  %s5 = inlined_call_operand.vmem [shape: bf16[32,32], index: 5, kind: input, shape index: {}]
  %s6 = inlined_call_operand.hbm [shape: f32[1,32], index: 6, kind: input, shape index: {}]
  %s7 = inlined_call_operand.hbm [shape: bf16[32,32], index: 7, kind: input, shape index: {}]
  %s8 = inlined_call_operand.hbm [shape: f32[1,32], index: 8, kind: input, shape index: {}]
  %s9 = inlined_call_operand.vmem [shape: bf16[32,32], index: 9, kind: input, shape index: {}]
  %s10 = inlined_call_operand.vmem [shape: f32[1,32], index: 10, kind: input, shape index: {}]
  %s11 = inlined_call_operand.hbm [shape: bf16[32,64], index: 11, kind: input, shape index: {}]
  %s12 = inlined_call_operand.vmem [shape: f32[1,64], index: 12, kind: input, shape index: {}]
  %s13 = inlined_call_operand.vmem [shape: bf16[64,32], index: 13, kind: input, shape index: {}]
  %s14 = inlined_call_operand.vmem [shape: f32[1,32], index: 14, kind: input, shape index: {}]
  %s15 = inlined_call_operand.hbm [shape: f32[2,8,32], index: 15, kind: output, shape index: {}]
  %s16 = sld [smem:[#allocation0]]
  $region121: #{tpu_custom_call.1} parent=0
    _
  %s18 = ssub.s32 1, %s16
  %s19 = scalar_select 0, %s18, %s16
  $region1: #{tpu_custom_call.1} parent=0
    #allocation5 [shape = 'u8[4096]{0}', space=vmem, size = 0x1000, scoped, tag = 'input window, operand 1']
    #allocation6 [shape = 's32[2]{0}', space=sflag, size = 0x8, scoped, tag = 'scoped memory for tpu_custom_call.1']
    #allocation7 [shape = 's32[2]{0}', space=sflag, size = 0x8, scoped, tag = 'scoped memory for tpu_custom_call.1']
    #allocation8 [shape = 'u8[512]{0}', space=vmem, size = 0x400, scoped, tag = 'input window, operand 4, single buffered']
    #allocation9 [shape = 's32[1]{0}', space=sflag, size = 0x4, scoped, tag = 'scoped memory for tpu_custom_call.1']
    #allocation10 [shape = 'u8[512]{0}', space=vmem, size = 0x400, scoped, tag = 'input window, operand 6, single buffered']
    #allocation11 [shape = 'u8[8192]{0}', space=vmem, size = 0x2000, scoped, tag = 'input window, operand 7, single buffered']
    #allocation12 [shape = 's32[1]{0}', space=sflag, size = 0x4, scoped, tag = 'scoped memory for tpu_custom_call.1']
    #allocation13 [shape = 'u8[512]{0}', space=vmem, size = 0x400, scoped, tag = 'input window, operand 8, single buffered']
    #allocation14 [shape = 'u8[8192]{0}', space=vmem, size = 0x2000, scoped, tag = 'input window, operand 11, single buffered']
    #allocation15 [shape = 's32[1]{0}', space=sflag, size = 0x4, scoped, tag = 'scoped memory for tpu_custom_call.1']
    #allocation16 [shape = 'u8[8192]{0}', space=vmem, size = 0x2000, scoped, tag = 'output window, operand 0']
    %20 = vsyncpa [#allocation6], 0
    %s21 = scalar_lea.sflag [#allocation6], 1
    %22 = vsyncpa %s21, 0
    %23 = vsyncpa [#allocation9], 0
    %24 = vsyncpa [#allocation12], 0
    %25 = vsyncpa [#allocation15], 0
    %26 = vsyncpa [#allocation7], 0
    %s27 = scalar_lea.sflag [#allocation7], 1
    %28 = vsyncpa %s27, 0
    loop: start=0, step=1, limit=4
    $region2: #{tpu_custom_call.1} parent=1 // loop_pre_header
      _
    $region3: #{tpu_custom_call.1} parent=1 // loop_header
      %s30 = sphi 0, %s34
      %p31 = scmp.ge.s32.totalorder %s30, 4
      %s37 = sphi 0, %s49
      %s38 = sphi 0, %s45
      %s39 = sphi 0, %s37
      %s40 = sphi 0, %s38
      %s41 = sphi 0, %s39
      %s42 = sphi 0, %s40
      %s54 = sphi 0, %s56
      %s57 = sphi 0, %s54
      %s58 = sphi 0, %s57
      %s74 = sphi 0, %s58
      %s80 = sphi 0, %s82
      %s83 = sphi 0, %s80
      %s84 = sphi 0, %s83
      %s100 = sphi 0, %s84
      %s106 = sphi 0, %s108
      %s109 = sphi 0, %s106
      %s110 = sphi 0, %s109
      %s126 = sphi 0, %s110
      %s130 = sphi 0, %s130
      %s132 = sphi 0, %s130
      %s133 = sphi 0, %s132
      %s147 = sphi 0, %s133
      %s151 = sphi 0, %s151
      %s153 = sphi 0, %s151
      %s154 = sphi 0, %s153
      %s168 = sphi 0, %s154
      %s172 = sphi 0, %s172
      %s174 = sphi 0, %s172
      %s175 = sphi 0, %s174
      %s189 = sphi 0, %s175
      %s193 = sphi 0, %s193
      %s195 = sphi 0, %s193
      %s196 = sphi 0, %s195
      %s210 = sphi 0, %s196
      %s214 = sphi 0, %s214
      %s216 = sphi 0, %s214
      %s217 = sphi 0, %s216
      %s231 = sphi 0, %s217
      %s235 = sphi 0, %s235
      %s237 = sphi 0, %s235
      %s238 = sphi 0, %s237
      %s252 = sphi 0, %s238
      %s256 = sphi 0, %s256
      %s258 = sphi 0, %s256
      %s259 = sphi 0, %s258
      %s273 = sphi 0, %s259
      %s277 = sphi 0, %s277
      %s279 = sphi 0, %s277
      %s280 = sphi 0, %s279
      %s294 = sphi 0, %s280
      %s298 = sphi 0, %s298
      %s300 = sphi 0, %s298
      %s301 = sphi 0, %s300
      %s315 = sphi 0, %s301
      %s319 = sphi 0, %s319
      %s321 = sphi 0, %s319
      %s322 = sphi 0, %s321
      %s336 = sphi 0, %s322
      %s340 = sphi 0, %s340
      %s342 = sphi 0, %s340
      %s343 = sphi 0, %s342
      %s357 = sphi 0, %s343
      %s361 = sphi 0, %s361
      %s363 = sphi 0, %s361
      %s364 = sphi 0, %s363
      %s378 = sphi 0, %s364
      %s386 = sphi 0, %s388
      %s389 = sphi 0, %s386
      %s390 = sphi 0, %s389
      %s406 = sphi 0, %s390
    $region4: #{tpu_custom_call.1} parent=1 // loop_header_branch
      %33 = sbr.rel (%p31) target = $region8
    $region5: #{tpu_custom_call.1} parent=1 // loop_body
      %s35 = ssub.s32 %s30, 1
      %s36 = ssub.s32 %s30, 2
      %s43 = sadd.s32 1, %s38
      %p44 = scmp.ge.s32.totalorder %s43, 1
      %s45 = scalar_select %p44, 0, %s43
      %s46 = sadd.s32 1, %s37
      %s47 = scalar_select %p44, %s46, %s37
      %p48 = scmp.ge.s32.totalorder %s47, 2
      %s49 = scalar_select %p48, 0, %s47
      %s50 = ssub.s32 %s37, %s49
      %s51 = ssub.s32 %s38, %s45
      %s52 = sor.u32 %s50, %s51
      %p53 = scmp.eq.s32.totalorder %s52, 0
      %s55 = sadd.s32 %s54, 1
      %s56 = scalar_select %p53, %s54, %s55
      %p59 = pneg %p53
      %p60 = scmp.eq.s32.totalorder %s30, 1
      %p61 = por %p59, %p60
      %p62 = scmp.ne.s32.totalorder %s54, %s57
      %p63 = scmp.eq.s32.totalorder %s30, 0
      %p64 = por %p62, %p63
      %p65 = scmp.ne.s32.totalorder %s54, %s57
      %p66 = scmp.eq.s32.totalorder %s35, 1
      %p67 = por %p65, %p66
      %p68 = scmp.ne.s32.totalorder %s57, %s58
      %p69 = scmp.eq.s32.totalorder %s35, 0
      %p70 = por %p68, %p69
      %p71 = scmp.ne.s32.totalorder %s57, %s58
      %p72 = scmp.eq.s32.totalorder %s36, 1
      %p73 = por %p71, %p72
      %p75 = scmp.ne.s32.totalorder %s58, %s74
      %p76 = scmp.eq.s32.totalorder %s36, 0
      %p77 = por %p75, %p76
      %s78 = ssub.s32 %s37, %s49
      %p79 = scmp.eq.s32.totalorder %s78, 0
      %s81 = sadd.s32 %s80, 1
      %s82 = scalar_select %p79, %s80, %s81
      %p85 = pneg %p79
      %p86 = scmp.eq.s32.totalorder %s30, 1
      %p87 = por %p85, %p86
      %p88 = scmp.ne.s32.totalorder %s80, %s83
      %p89 = scmp.eq.s32.totalorder %s30, 0
      %p90 = por %p88, %p89
      %p91 = scmp.ne.s32.totalorder %s80, %s83
      %p92 = scmp.eq.s32.totalorder %s35, 1
      %p93 = por %p91, %p92
      %p94 = scmp.ne.s32.totalorder %s83, %s84
      %p95 = scmp.eq.s32.totalorder %s35, 0
      %p96 = por %p94, %p95
      %p97 = scmp.ne.s32.totalorder %s83, %s84
      %p98 = scmp.eq.s32.totalorder %s36, 1
      %p99 = por %p97, %p98
      %p101 = scmp.ne.s32.totalorder %s84, %s100
      %p102 = scmp.eq.s32.totalorder %s36, 0
      %p103 = por %p101, %p102
      %s104 = ssub.s32 %s37, %s49
      %p105 = scmp.eq.s32.totalorder %s104, 0
      %s107 = sadd.s32 %s106, 1
      %s108 = scalar_select %p105, %s106, %s107
      %p111 = pneg %p105
      %p112 = scmp.eq.s32.totalorder %s30, 1
      %p113 = por %p111, %p112
      %p114 = scmp.ne.s32.totalorder %s106, %s109
      %p115 = scmp.eq.s32.totalorder %s30, 0
      %p116 = por %p114, %p115
      %p117 = scmp.ne.s32.totalorder %s106, %s109
      %p118 = scmp.eq.s32.totalorder %s35, 1
      %p119 = por %p117, %p118
      %p120 = scmp.ne.s32.totalorder %s109, %s110
      %p121 = scmp.eq.s32.totalorder %s35, 0
      %p122 = por %p120, %p121
      %p123 = scmp.ne.s32.totalorder %s109, %s110
      %p124 = scmp.eq.s32.totalorder %s36, 1
      %p125 = por %p123, %p124
      %p127 = scmp.ne.s32.totalorder %s110, %s126
      %p128 = scmp.eq.s32.totalorder %s36, 0
      %p129 = por %p127, %p128
      %s131 = sadd.s32 %s130, 1
      %p134 = scmp.eq.s32.totalorder %s30, 1
      %p135 = scmp.ne.s32.totalorder %s130, %s132
      %p136 = scmp.eq.s32.totalorder %s30, 0
      %p137 = por %p135, %p136
      %p138 = scmp.ne.s32.totalorder %s130, %s132
      %p139 = scmp.eq.s32.totalorder %s35, 1
      %p140 = por %p138, %p139
      %p141 = scmp.ne.s32.totalorder %s132, %s133
      %p142 = scmp.eq.s32.totalorder %s35, 0
      %p143 = por %p141, %p142
      %p144 = scmp.ne.s32.totalorder %s132, %s133
      %p145 = scmp.eq.s32.totalorder %s36, 1
      %p146 = por %p144, %p145
      %p148 = scmp.ne.s32.totalorder %s133, %s147
      %p149 = scmp.eq.s32.totalorder %s36, 0
      %p150 = por %p148, %p149
      %s152 = sadd.s32 %s151, 1
      %p155 = scmp.eq.s32.totalorder %s30, 1
      %p156 = scmp.ne.s32.totalorder %s151, %s153
      %p157 = scmp.eq.s32.totalorder %s30, 0
      %p158 = por %p156, %p157
      %p159 = scmp.ne.s32.totalorder %s151, %s153
      %p160 = scmp.eq.s32.totalorder %s35, 1
      %p161 = por %p159, %p160
      %p162 = scmp.ne.s32.totalorder %s153, %s154
      %p163 = scmp.eq.s32.totalorder %s35, 0
      %p164 = por %p162, %p163
      %p165 = scmp.ne.s32.totalorder %s153, %s154
      %p166 = scmp.eq.s32.totalorder %s36, 1
      %p167 = por %p165, %p166
      %p169 = scmp.ne.s32.totalorder %s154, %s168
      %p170 = scmp.eq.s32.totalorder %s36, 0
      %p171 = por %p169, %p170
      %s173 = sadd.s32 %s172, 1
      %p176 = scmp.eq.s32.totalorder %s30, 1
      %p177 = scmp.ne.s32.totalorder %s172, %s174
      %p178 = scmp.eq.s32.totalorder %s30, 0
      %p179 = por %p177, %p178
      %p180 = scmp.ne.s32.totalorder %s172, %s174
      %p181 = scmp.eq.s32.totalorder %s35, 1
      %p182 = por %p180, %p181
      %p183 = scmp.ne.s32.totalorder %s174, %s175
      %p184 = scmp.eq.s32.totalorder %s35, 0
      %p185 = por %p183, %p184
      %p186 = scmp.ne.s32.totalorder %s174, %s175
      %p187 = scmp.eq.s32.totalorder %s36, 1
      %p188 = por %p186, %p187
      %p190 = scmp.ne.s32.totalorder %s175, %s189
      %p191 = scmp.eq.s32.totalorder %s36, 0
      %p192 = por %p190, %p191
      %s194 = sadd.s32 %s193, 1
      %p197 = scmp.eq.s32.totalorder %s30, 1
      %p198 = scmp.ne.s32.totalorder %s193, %s195
      %p199 = scmp.eq.s32.totalorder %s30, 0
      %p200 = por %p198, %p199
      %p201 = scmp.ne.s32.totalorder %s193, %s195
      %p202 = scmp.eq.s32.totalorder %s35, 1
      %p203 = por %p201, %p202
      %p204 = scmp.ne.s32.totalorder %s195, %s196
      %p205 = scmp.eq.s32.totalorder %s35, 0
      %p206 = por %p204, %p205
      %p207 = scmp.ne.s32.totalorder %s195, %s196
      %p208 = scmp.eq.s32.totalorder %s36, 1
      %p209 = por %p207, %p208
      %p211 = scmp.ne.s32.totalorder %s196, %s210
      %p212 = scmp.eq.s32.totalorder %s36, 0
      %p213 = por %p211, %p212
      %s215 = sadd.s32 %s214, 1
      %p218 = scmp.eq.s32.totalorder %s30, 1
      %p219 = scmp.ne.s32.totalorder %s214, %s216
      %p220 = scmp.eq.s32.totalorder %s30, 0
      %p221 = por %p219, %p220
      %p222 = scmp.ne.s32.totalorder %s214, %s216
      %p223 = scmp.eq.s32.totalorder %s35, 1
      %p224 = por %p222, %p223
      %p225 = scmp.ne.s32.totalorder %s216, %s217
      %p226 = scmp.eq.s32.totalorder %s35, 0
      %p227 = por %p225, %p226
      %p228 = scmp.ne.s32.totalorder %s216, %s217
      %p229 = scmp.eq.s32.totalorder %s36, 1
      %p230 = por %p228, %p229
      %p232 = scmp.ne.s32.totalorder %s217, %s231
      %p233 = scmp.eq.s32.totalorder %s36, 0
      %p234 = por %p232, %p233
      %s236 = sadd.s32 %s235, 1
      %p239 = scmp.eq.s32.totalorder %s30, 1
      %p240 = scmp.ne.s32.totalorder %s235, %s237
      %p241 = scmp.eq.s32.totalorder %s30, 0
      %p242 = por %p240, %p241
      %p243 = scmp.ne.s32.totalorder %s235, %s237
      %p244 = scmp.eq.s32.totalorder %s35, 1
      %p245 = por %p243, %p244
      %p246 = scmp.ne.s32.totalorder %s237, %s238
      %p247 = scmp.eq.s32.totalorder %s35, 0
      %p248 = por %p246, %p247
      %p249 = scmp.ne.s32.totalorder %s237, %s238
      %p250 = scmp.eq.s32.totalorder %s36, 1
      %p251 = por %p249, %p250
      %p253 = scmp.ne.s32.totalorder %s238, %s252
      %p254 = scmp.eq.s32.totalorder %s36, 0
      %p255 = por %p253, %p254
      %s257 = sadd.s32 %s256, 1
      %p260 = scmp.eq.s32.totalorder %s30, 1
      %p261 = scmp.ne.s32.totalorder %s256, %s258
      %p262 = scmp.eq.s32.totalorder %s30, 0
      %p263 = por %p261, %p262
      %p264 = scmp.ne.s32.totalorder %s256, %s258
      %p265 = scmp.eq.s32.totalorder %s35, 1
      %p266 = por %p264, %p265
      %p267 = scmp.ne.s32.totalorder %s258, %s259
      %p268 = scmp.eq.s32.totalorder %s35, 0
      %p269 = por %p267, %p268
      %p270 = scmp.ne.s32.totalorder %s258, %s259
      %p271 = scmp.eq.s32.totalorder %s36, 1
      %p272 = por %p270, %p271
      %p274 = scmp.ne.s32.totalorder %s259, %s273
      %p275 = scmp.eq.s32.totalorder %s36, 0
      %p276 = por %p274, %p275
      %s278 = sadd.s32 %s277, 1
      %p281 = scmp.eq.s32.totalorder %s30, 1
      %p282 = scmp.ne.s32.totalorder %s277, %s279
      %p283 = scmp.eq.s32.totalorder %s30, 0
      %p284 = por %p282, %p283
      %p285 = scmp.ne.s32.totalorder %s277, %s279
      %p286 = scmp.eq.s32.totalorder %s35, 1
      %p287 = por %p285, %p286
      %p288 = scmp.ne.s32.totalorder %s279, %s280
      %p289 = scmp.eq.s32.totalorder %s35, 0
      %p290 = por %p288, %p289
      %p291 = scmp.ne.s32.totalorder %s279, %s280
      %p292 = scmp.eq.s32.totalorder %s36, 1
      %p293 = por %p291, %p292
      %p295 = scmp.ne.s32.totalorder %s280, %s294
      %p296 = scmp.eq.s32.totalorder %s36, 0
      %p297 = por %p295, %p296
      %s299 = sadd.s32 %s298, 1
      %p302 = scmp.eq.s32.totalorder %s30, 1
      %p303 = scmp.ne.s32.totalorder %s298, %s300
      %p304 = scmp.eq.s32.totalorder %s30, 0
      %p305 = por %p303, %p304
      %p306 = scmp.ne.s32.totalorder %s298, %s300
      %p307 = scmp.eq.s32.totalorder %s35, 1
      %p308 = por %p306, %p307
      %p309 = scmp.ne.s32.totalorder %s300, %s301
      %p310 = scmp.eq.s32.totalorder %s35, 0
      %p311 = por %p309, %p310
      %p312 = scmp.ne.s32.totalorder %s300, %s301
      %p313 = scmp.eq.s32.totalorder %s36, 1
      %p314 = por %p312, %p313
      %p316 = scmp.ne.s32.totalorder %s301, %s315
      %p317 = scmp.eq.s32.totalorder %s36, 0
      %p318 = por %p316, %p317
      %s320 = sadd.s32 %s319, 1
      %p323 = scmp.eq.s32.totalorder %s30, 1
      %p324 = scmp.ne.s32.totalorder %s319, %s321
      %p325 = scmp.eq.s32.totalorder %s30, 0
      %p326 = por %p324, %p325
      %p327 = scmp.ne.s32.totalorder %s319, %s321
      %p328 = scmp.eq.s32.totalorder %s35, 1
      %p329 = por %p327, %p328
      %p330 = scmp.ne.s32.totalorder %s321, %s322
      %p331 = scmp.eq.s32.totalorder %s35, 0
      %p332 = por %p330, %p331
      %p333 = scmp.ne.s32.totalorder %s321, %s322
      %p334 = scmp.eq.s32.totalorder %s36, 1
      %p335 = por %p333, %p334
      %p337 = scmp.ne.s32.totalorder %s322, %s336
      %p338 = scmp.eq.s32.totalorder %s36, 0
      %p339 = por %p337, %p338
      %s341 = sadd.s32 %s340, 1
      %p344 = scmp.eq.s32.totalorder %s30, 1
      %p345 = scmp.ne.s32.totalorder %s340, %s342
      %p346 = scmp.eq.s32.totalorder %s30, 0
      %p347 = por %p345, %p346
      %p348 = scmp.ne.s32.totalorder %s340, %s342
      %p349 = scmp.eq.s32.totalorder %s35, 1
      %p350 = por %p348, %p349
      %p351 = scmp.ne.s32.totalorder %s342, %s343
      %p352 = scmp.eq.s32.totalorder %s35, 0
      %p353 = por %p351, %p352
      %p354 = scmp.ne.s32.totalorder %s342, %s343
      %p355 = scmp.eq.s32.totalorder %s36, 1
      %p356 = por %p354, %p355
      %p358 = scmp.ne.s32.totalorder %s343, %s357
      %p359 = scmp.eq.s32.totalorder %s36, 0
      %p360 = por %p358, %p359
      %s362 = sadd.s32 %s361, 1
      %p365 = scmp.eq.s32.totalorder %s30, 1
      %p366 = scmp.ne.s32.totalorder %s361, %s363
      %p367 = scmp.eq.s32.totalorder %s30, 0
      %p368 = por %p366, %p367
      %p369 = scmp.ne.s32.totalorder %s361, %s363
      %p370 = scmp.eq.s32.totalorder %s35, 1
      %p371 = por %p369, %p370
      %p372 = scmp.ne.s32.totalorder %s363, %s364
      %p373 = scmp.eq.s32.totalorder %s35, 0
      %p374 = por %p372, %p373
      %p375 = scmp.ne.s32.totalorder %s363, %s364
      %p376 = scmp.eq.s32.totalorder %s36, 1
      %p377 = por %p375, %p376
      %p379 = scmp.ne.s32.totalorder %s364, %s378
      %p380 = scmp.eq.s32.totalorder %s36, 0
      %p381 = por %p379, %p380
      %s382 = ssub.s32 %s37, %s49
      %s383 = ssub.s32 %s38, %s45
      %s384 = sor.u32 %s382, %s383
      %p385 = scmp.eq.s32.totalorder %s384, 0
      %s387 = sadd.s32 %s386, 1
      %s388 = scalar_select %p385, %s386, %s387
      %p391 = pneg %p385
      %p392 = scmp.eq.s32.totalorder %s30, 1
      %p393 = por %p391, %p392
      %p394 = scmp.ne.s32.totalorder %s386, %s389
      %p395 = scmp.eq.s32.totalorder %s30, 0
      %p396 = por %p394, %p395
      %p397 = scmp.ne.s32.totalorder %s386, %s389
      %p398 = scmp.eq.s32.totalorder %s35, 1
      %p399 = por %p397, %p398
      %p400 = scmp.ne.s32.totalorder %s389, %s390
      %p401 = scmp.eq.s32.totalorder %s35, 0
      %p402 = por %p400, %p401
      %p403 = scmp.ne.s32.totalorder %s389, %s390
      %p404 = scmp.eq.s32.totalorder %s36, 1
      %p405 = por %p403, %p404
      %p407 = scmp.ne.s32.totalorder %s390, %s406
      %p408 = scmp.eq.s32.totalorder %s36, 0
      %p409 = por %p407, %p408
      %p410 = scmp.le.s32.totalorder 1, %s30
      %p411 = scmp.lt.s32.totalorder %s30, 3
      %p412 = pnand %p410, %p411
      %p413 = pneg %p412
      // Predicated region
      $region9: #{tpu_custom_call.1} parent=5 // pred_check
        _
      $region10: #{tpu_custom_call.1} parent=5 // pred_check_branch
        %415 = sbr.rel (%p412) target = $region12
      $region11: #{tpu_custom_call.1} parent=5 // pred_region
        %s416 = ssub.s32 %s30, 1
        // Predicated region
        $region13: #{tpu_custom_call.1} parent=11 // pred_check
          %p417 = pneg %p143
        $region14: #{tpu_custom_call.1} parent=11 // pred_check_branch
          %419 = sbr.rel (%p417) target = $region16
        $region15: #{tpu_custom_call.1} parent=11 // pred_region
          _
        $region16: #{tpu_custom_call.1} parent=11 // pred_fallthru
          _
        // Predicated region
        $region17: #{tpu_custom_call.1} parent=11 // pred_check
          %p420 = pneg %p164
        $region18: #{tpu_custom_call.1} parent=11 // pred_check_branch
          %422 = sbr.rel (%p420) target = $region20
        $region19: #{tpu_custom_call.1} parent=11 // pred_region
          %s424 = ssub.s32 16, 16
          %425 = vsyncadd [#allocation9], %s424
          %s427 = sshll.u32 [#allocation8], 4
          %s428 = int_to_ptr.vmem [resolvable:$true] %s427
          %430 = dma.hbm_to_vmem [thread:$0]  %s4, 16, %s428, [#allocation9]
        $region20: #{tpu_custom_call.1} parent=11 // pred_fallthru
          _
        // Predicated region
        $region21: #{tpu_custom_call.1} parent=11 // pred_check
          %p431 = pneg %p185
        $region22: #{tpu_custom_call.1} parent=11 // pred_check_branch
          %433 = sbr.rel (%p431) target = $region24
        $region23: #{tpu_custom_call.1} parent=11 // pred_region
          _
        $region24: #{tpu_custom_call.1} parent=11 // pred_fallthru
          _
        // Predicated region
        $region25: #{tpu_custom_call.1} parent=11 // pred_check
          %p434 = pneg %p206
        $region26: #{tpu_custom_call.1} parent=11 // pred_check_branch
          %436 = sbr.rel (%p434) target = $region28
        $region27: #{tpu_custom_call.1} parent=11 // pred_region
          %s438 = ssub.s32 16, 16
          %439 = vsyncadd [#allocation9], %s438
          %s441 = sshll.u32 [#allocation10], 4
          %s442 = int_to_ptr.vmem [resolvable:$true] %s441
          %444 = dma.hbm_to_vmem [thread:$0]  %s6, 16, %s442, [#allocation9]
        $region28: #{tpu_custom_call.1} parent=11 // pred_fallthru
          _
        // Predicated region
        $region29: #{tpu_custom_call.1} parent=11 // pred_check
          %p445 = pneg %p227
        $region30: #{tpu_custom_call.1} parent=11 // pred_check_branch
          %447 = sbr.rel (%p445) target = $region32
        $region31: #{tpu_custom_call.1} parent=11 // pred_region
          %s449 = ssub.s32 256, 256
          %450 = vsyncadd [#allocation12], %s449
          %s451 = sshll.u32 [#allocation11], 4
          %s452 = int_to_ptr.vmem [resolvable:$true] %s451
          %457 = dma.hbm_to_vmem [thread:$0]  %s7, 256, %s452, [#allocation12], 64, 64, 4
        $region32: #{tpu_custom_call.1} parent=11 // pred_fallthru
          _
        // Predicated region
        $region33: #{tpu_custom_call.1} parent=11 // pred_check
          %p458 = pneg %p248
        $region34: #{tpu_custom_call.1} parent=11 // pred_check_branch
          %460 = sbr.rel (%p458) target = $region36
        $region35: #{tpu_custom_call.1} parent=11 // pred_region
          %s462 = ssub.s32 16, 16
          %463 = vsyncadd [#allocation12], %s462
          %s465 = sshll.u32 [#allocation13], 4
          %s466 = int_to_ptr.vmem [resolvable:$true] %s465
          %468 = dma.hbm_to_vmem [thread:$0]  %s8, 16, %s466, [#allocation12]
        $region36: #{tpu_custom_call.1} parent=11 // pred_fallthru
          _
        // Predicated region
        $region37: #{tpu_custom_call.1} parent=11 // pred_check
          %p469 = pneg %p269
        $region38: #{tpu_custom_call.1} parent=11 // pred_check_branch
          %471 = sbr.rel (%p469) target = $region40
        $region39: #{tpu_custom_call.1} parent=11 // pred_region
          _
        $region40: #{tpu_custom_call.1} parent=11 // pred_fallthru
          _
        // Predicated region
        $region41: #{tpu_custom_call.1} parent=11 // pred_check
          %p472 = pneg %p290
        $region42: #{tpu_custom_call.1} parent=11 // pred_check_branch
          %474 = sbr.rel (%p472) target = $region44
        $region43: #{tpu_custom_call.1} parent=11 // pred_region
          _
        $region44: #{tpu_custom_call.1} parent=11 // pred_fallthru
          _
        // Predicated region
        $region45: #{tpu_custom_call.1} parent=11 // pred_check
          %p475 = pneg %p311
        $region46: #{tpu_custom_call.1} parent=11 // pred_check_branch
          %477 = sbr.rel (%p475) target = $region48
        $region47: #{tpu_custom_call.1} parent=11 // pred_region
          %s479 = ssub.s32 256, 256
          %480 = vsyncadd [#allocation15], %s479
          %s481 = sshll.u32 [#allocation14], 4
          %s482 = int_to_ptr.vmem [resolvable:$true] %s481
          %487 = dma.hbm_to_vmem [thread:$0]  %s11, 256, %s482, [#allocation15], 64, 64, 4
        $region48: #{tpu_custom_call.1} parent=11 // pred_fallthru
          _
        // Predicated region
        $region49: #{tpu_custom_call.1} parent=11 // pred_check
          %p488 = pneg %p332
        $region50: #{tpu_custom_call.1} parent=11 // pred_check_branch
          %490 = sbr.rel (%p488) target = $region52
        $region51: #{tpu_custom_call.1} parent=11 // pred_region
          _
        $region52: #{tpu_custom_call.1} parent=11 // pred_fallthru
          _
        // Predicated region
        $region53: #{tpu_custom_call.1} parent=11 // pred_check
          %p491 = pneg %p353
        $region54: #{tpu_custom_call.1} parent=11 // pred_check_branch
          %493 = sbr.rel (%p491) target = $region56
        $region55: #{tpu_custom_call.1} parent=11 // pred_region
          _
        $region56: #{tpu_custom_call.1} parent=11 // pred_fallthru
          _
        // Predicated region
        $region57: #{tpu_custom_call.1} parent=11 // pred_check
          %p494 = pneg %p374
        $region58: #{tpu_custom_call.1} parent=11 // pred_check_branch
          %496 = sbr.rel (%p494) target = $region60
        $region59: #{tpu_custom_call.1} parent=11 // pred_region
          _
        $region60: #{tpu_custom_call.1} parent=11 // pred_fallthru
          _
      $region12: #{tpu_custom_call.1} parent=5 // pred_fallthru
        _
      %p497 = scmp.lt.s32.totalorder %s30, 2
      // Predicated region
      $region61: #{tpu_custom_call.1} parent=5 // pred_check
        %p498 = pneg %p497
      $region62: #{tpu_custom_call.1} parent=5 // pred_check_branch
        %500 = sbr.rel (%p498) target = $region64
      $region63: #{tpu_custom_call.1} parent=5 // pred_region
        // Predicated region
        $region65: #{tpu_custom_call.1} parent=63 // pred_check
          %p501 = pneg %p64
        $region66: #{tpu_custom_call.1} parent=63 // pred_check_branch
          %503 = sbr.rel (%p501) target = $region68
        $region67: #{tpu_custom_call.1} parent=63 // pred_region
          %p504 = scmp.lt.s32.totalorder %s37, 1
          %s505 = scalar_select %p504, %s37, 1
          %p506 = scmp.lt.s32.totalorder %s38, 0
          %s507 = scalar_select %p506, %s38, 0
          %s508 = sadd.s32 %s507, %s505
          %s509 = smul.addr %s508, 8
          %s510 = scalar_lea.vmem %s0, %s509
        $region68: #{tpu_custom_call.1} parent=63 // pred_fallthru
          _
        // Predicated region
        $region69: #{tpu_custom_call.1} parent=63 // pred_check
          %p511 = pneg %p90
        $region70: #{tpu_custom_call.1} parent=63 // pred_check_branch
          %513 = sbr.rel (%p511) target = $region72
        $region71: #{tpu_custom_call.1} parent=63 // pred_region
          %s514 = sand.u32 %s80, 1
          %s515 = scalar_lea.sflag [#allocation6], %s514
          %s516 = sand.u32 %s80, 1
          %s517 = smul.addr %s516, 4
          %s518 = scalar_lea.vmem [#allocation5], %s517
          %s520 = ssub.s32 64, 64
          %521 = vsyncadd %s515, %s520
          %s522 = smul.addr %s37, 64
          %s523 = scalar_lea.hbm %s1, %s522
          %s525 = sshll.u32 %s518, 4
          %s526 = int_to_ptr.vmem [resolvable:$true] %s525
          %528 = dma.hbm_to_vmem [thread:$0]  %s523, 64, %s526, %s515
        $region72: #{tpu_custom_call.1} parent=63 // pred_fallthru
          _
        // Predicated region
        $region73: #{tpu_custom_call.1} parent=63 // pred_check
          %p529 = pneg %p116
        $region74: #{tpu_custom_call.1} parent=63 // pred_check_branch
          %531 = sbr.rel (%p529) target = $region76
        $region75: #{tpu_custom_call.1} parent=63 // pred_region
          %p532 = scmp.lt.s32.totalorder %s37, 1
          %s533 = scalar_select %p532, %s37, 1
          %s534 = scalar_lea.vmem %s2, %s533
        $region76: #{tpu_custom_call.1} parent=63 // pred_fallthru
          _
      $region64: #{tpu_custom_call.1} parent=5 // pred_fallthru
        _
      %p535 = scmp.le.s32.totalorder 1, %s30
      %p536 = scmp.lt.s32.totalorder %s30, 3
      %p537 = pnand %p535, %p536
      %p538 = pneg %p537
      // Predicated region
      $region77: #{tpu_custom_call.1} parent=5 // pred_check
        _
      $region78: #{tpu_custom_call.1} parent=5 // pred_check_branch
        %540 = sbr.rel (%p537) target = $region80
      $region79: #{tpu_custom_call.1} parent=5 // pred_region
        %s541 = ssub.s32 %s30, 1
        %s542 = sand.u32 %s83, 1
        %s543 = scalar_lea.sflag [#allocation6], %s542
        %s544 = sand.u32 %s83, 1
        %s545 = smul.addr %s544, 4
        %s546 = scalar_lea.vmem [#allocation5], %s545
        // Predicated region
        $region81: #{tpu_custom_call.1} parent=79 // pred_check
          %p547 = pneg %p96
        $region82: #{tpu_custom_call.1} parent=79 // pred_check_branch
          %549 = sbr.rel (%p547) target = $region84
        $region83: #{tpu_custom_call.1} parent=79 // pred_region
          %550 = dma.done %s543, 64
        $region84: #{tpu_custom_call.1} parent=79 // pred_fallthru
          _
        // Predicated region
        $region85: #{tpu_custom_call.1} parent=79 // pred_check
          %p551 = pneg %p164
        $region86: #{tpu_custom_call.1} parent=79 // pred_check_branch
          %553 = sbr.rel (%p551) target = $region88
        $region87: #{tpu_custom_call.1} parent=79 // pred_region
          %554 = dma.done [#allocation9], 16
        $region88: #{tpu_custom_call.1} parent=79 // pred_fallthru
          _
        // Predicated region
        $region89: #{tpu_custom_call.1} parent=79 // pred_check
          %p555 = pneg %p206
        $region90: #{tpu_custom_call.1} parent=79 // pred_check_branch
          %557 = sbr.rel (%p555) target = $region92
        $region91: #{tpu_custom_call.1} parent=79 // pred_region
          %558 = dma.done [#allocation9], 16
        $region92: #{tpu_custom_call.1} parent=79 // pred_fallthru
          _
        // Predicated region
        $region93: #{tpu_custom_call.1} parent=79 // pred_check
          %p559 = pneg %p227
        $region94: #{tpu_custom_call.1} parent=79 // pred_check_branch
          %561 = sbr.rel (%p559) target = $region96
        $region95: #{tpu_custom_call.1} parent=79 // pred_region
          %562 = dma.done [#allocation12], 256
        $region96: #{tpu_custom_call.1} parent=79 // pred_fallthru
          _
        // Predicated region
        $region97: #{tpu_custom_call.1} parent=79 // pred_check
          %p563 = pneg %p248
        $region98: #{tpu_custom_call.1} parent=79 // pred_check_branch
          %565 = sbr.rel (%p563) target = $region100
        $region99: #{tpu_custom_call.1} parent=79 // pred_region
          %566 = dma.done [#allocation12], 16
        $region100: #{tpu_custom_call.1} parent=79 // pred_fallthru
          _
        // Predicated region
        $region101: #{tpu_custom_call.1} parent=79 // pred_check
          %p567 = pneg %p311
        $region102: #{tpu_custom_call.1} parent=79 // pred_check_branch
          %569 = sbr.rel (%p567) target = $region104
        $region103: #{tpu_custom_call.1} parent=79 // pred_region
          %570 = dma.done [#allocation15], 256
        $region104: #{tpu_custom_call.1} parent=79 // pred_fallthru
          _
        %p571 = scmp.lt.s32.totalorder %s39, 1
        %s572 = scalar_select %p571, %s39, 1
        %p573 = scmp.lt.s32.totalorder %s40, 0
        %s574 = scalar_select %p573, %s40, 0
        %s575 = sadd.s32 %s574, %s572
        %s576 = smul.addr %s575, 8
        %s577 = scalar_lea.vmem %s0, %s576
        %p578 = pneg %p70
        %p579 = pneg %p67
        %s580 = sand.u32 %s83, 1
        %s581 = scalar_lea.sflag [#allocation6], %s580
        %s582 = sand.u32 %s83, 1
        %s583 = smul.addr %s582, 4
        %s584 = scalar_lea.vmem [#allocation5], %s583
        %p585 = pneg %p96
        %p586 = pneg %p93
        %p587 = scmp.lt.s32.totalorder %s39, 1
        %s588 = scalar_select %p587, %s39, 1
        %s589 = scalar_lea.vmem %s2, %s588
        %p590 = pneg %p122
        %p591 = pneg %p119
        %p592 = pneg %p143
        %p593 = pneg %p140
        %p594 = pneg %p164
        %p595 = pneg %p161
        %p596 = pneg %p185
        %p597 = pneg %p182
        %p598 = pneg %p206
        %p599 = pneg %p203
        %p600 = pneg %p227
        %p601 = pneg %p224
        %p602 = pneg %p248
        %p603 = pneg %p245
        %p604 = pneg %p269
        %p605 = pneg %p266
        %p606 = pneg %p290
        %p607 = pneg %p287
        %p608 = pneg %p311
        %p609 = pneg %p308
        %p610 = pneg %p332
        %p611 = pneg %p329
        %p612 = pneg %p353
        %p613 = pneg %p350
        %p614 = pneg %p374
        %p615 = pneg %p371
        %p616 = pneg %p402
        %p617 = pneg %p399
        %s618 = sand.u32 %s389, 1
        %s619 = scalar_lea.sflag [#allocation7], %s618
        %s620 = sand.u32 %s389, 1
        %s621 = smul.addr %s620, 8
        %s622 = scalar_lea.vmem [#allocation16], %s621
        %p623 = scmp.lt.s32.totalorder %s39, 1
        %s624 = scalar_select %p623, %s39, 1
        %p625 = scmp.lt.s32.totalorder %s40, 0
        %s626 = scalar_select %p625, %s40, 0
        %s627 = sadd.s32 %s626, %s624
        %s628 = smul.addr %s627, 8
        %s629 = scalar_lea.vmem %s0, %s628
        %p630 = scmp.lt.s32.totalorder %s39, 1
        %s631 = scalar_select %p630, %s39, 1
        %s632 = scalar_lea.vmem %s2, %s631
        %p634 = scmp.eq.s32.totalorder %s40, 0
        // Predicated region
        $region105: #{tpu_custom_call.1} parent=79 // pred_check
          %p635 = pneg %p634
        $region106: #{tpu_custom_call.1} parent=79 // pred_check_branch
          %637 = sbr.rel (%p635) target = $region108
        $region107: #{tpu_custom_call.1} parent=79 // pred_region
          %v638 = vld [vmem:[%s546] sm:$0xf]
          %v639 = vunpack.c.l.bf16 %v638
          %vm640 = vcmask 261120
          %v641 = vsel %vm640, %v639, 0.0
          %642 = vadd.xlane.f32.xlu0 %v641
          %v643 = vpop.xlane.xlu0 %642
          %v644 = vrcp.pop 32.0
          %v645 = vmul.f32 %v643, %v644
          %v646 = vsub.f32 %v639, %v645
          %v647 = vmul.f32 %v646, %v646
          %v648 = vsel %vm640, %v647, 0.0
          %649 = vadd.xlane.f32.xlu0 %v648
          %v650 = vpop.xlane.xlu0 %649
          %v651 = vmul.f32 %v650, 0.032258064
          %v652 = vrsqrt.pop %v651
          %v653 = vmul.f32 %v651, %v652
          %vm654 = vcmp.eq.f32.partialorder %v651, inf
          %v655 = vsel %vm654, %v651, %v653
          %vm656 = vcmp.eq.f32.partialorder %v651, 0.0
          %v657 = vand.u32 %v651, 2147483648
          %v658 = vsel %vm656, %v657, %v655
          %v659 = vadd.f32 %v658, 1e-06
          %v660 = vrcp.pop %v659
          %v661 = vmul.f32 %v646, %v660
          %v662 = vpack.c.bf16 %v661, %v661
          %v663 = vld [vmem:[%s5] sm:$0xf]
          %v664 = vld [vmem:[%s5 + $0x4] sm:$0xf]
          %v665 = vld [vmem:[%s5 + $0x8] sm:$0xf]
          %v666 = vld [vmem:[%s5 + $0xc] sm:$0xf]
          %v667 = vld [vmem:[#allocation10] sm:$0x1]
          %v669 = vlaneseq
          %v670 = vshrl.u32 %v669, 7
          %v671 = vsub.s32 0, %v670
          %v672 = vrot.slane %v667, %v671
          %v678 = vunpack.c.l.b16 %v663
          %v679 = vunpack.c.l.b16 %v664
          %v680 = vunpack.c.l.b16 %v665
          %v681 = vunpack.c.l.b16 %v666
          %v682 = vpack.c.b16 %v679, %v678
          %v683 = vpack.c.b16 %v681, %v680
          %v687 = vsel %vm640, %v662, 0
          %689 = vmatprep.subr.bf16.mxu0 0
          %690 = vmatpush1.bf16.msra.mxu0 %v682
          %691 = vmatprep.subr.bf16.mxu0 0
          %692 = vmatpush1.bf16.msra.mxu0 %v683
          %693 = vmatprep.subr.bf16.mxu0 0
          %694 = vmatpush1.bf16.msra.mxu0 0
          %695 = vmatprep.subr.bf16.mxu0 0
          %696 = vmatpush1.bf16.msra.mxu0 0
          %697 = vmatprep.subr.bf16.mxu0 0
          %698 = vmatpush1.bf16.msra.mxu0 0
          %699 = vmatprep.subr.bf16.mxu0 0
          %700 = vmatpush1.bf16.msra.mxu0 0
          %701 = vmatprep.subr.bf16.mxu0 0
          %702 = vmatpush1.bf16.msra.mxu0 0
          %703 = vmatprep.subr.bf16.mxu0 0
          %704 = vmatpush1.bf16.msra.mxu0 0
          %705 = vmatprep.subr.bf16.mxu0 0
          %706 = vmatpush1.bf16.msra.mxu0 0
          %707 = vmatprep.subr.bf16.mxu0 0
          %708 = vmatpush1.bf16.msra.mxu0 0
          %709 = vmatprep.subr.bf16.mxu0 0
          %710 = vmatpush1.bf16.msra.mxu0 0
          %711 = vmatprep.subr.bf16.mxu0 0
          %712 = vmatpush1.bf16.msra.mxu0 0
          %713 = vmatprep.subr.bf16.mxu0 0
          %714 = vmatpush1.bf16.msra.mxu0 0
          %715 = vmatprep.subr.bf16.mxu0 0
          %716 = vmatpush1.bf16.msra.mxu0 0
          %717 = vmatprep.subr.bf16.mxu0 0
          %718 = vmatpush1.bf16.msra.mxu0 0
          %719 = vmatprep.subr.bf16.mxu0 0
          %720 = vmatpush1.bf16.msra.mxu0 0
          %721 = vmatprep.mubr.bf16.mxu0 0
          %722 = vmatmul.mubr.bf16.gmra.mrb[0].mxu0 %v687
          %v723 = vpop.f32.mrb[0].mxu0
          %v724 = vadd.f32 %v672, %v723
          %v725 = vpop.f32.mrb[0].mxu0
          %v726 = vpop.f32.mrb[0].mxu0
          %v727 = vpop.f32.mrb[0].mxu0
          %728 = vdwg.mxu0
          %v729 = vpack.c.bf16 %v724, %v724
          %vm730 = vcmask 60416
          %731 = vst.msk [vmem:[#allocation2] sm:$0xf] %vm730, %v729
          %v733 = vunpack.c.l.b16 %v729
          %v734 = vpack.c.b16 %v733, %v733
          %735 = vrot.lane.b32.xlu0 %v734, 120
          %v736 = vpop.permute.xlu0 %735
          %s738 = scalar_lea.vmem [#allocation2], 4
          %739 = vst.msk [vmem:[%s738] sm:$0xf] %vm730, %v736
          %740 = vrot.lane.b32.xlu0 %v734, 112
          %v741 = vpop.permute.xlu0 %740
          %s743 = scalar_lea.vmem [#allocation2], 8
          %744 = vst.msk [vmem:[%s743] sm:$0xf] %vm730, %v741
          %745 = vrot.lane.b32.xlu0 %v734, 104
          %v746 = vpop.permute.xlu0 %745
          %s748 = scalar_lea.vmem [#allocation2], 12
          %749 = vst.msk [vmem:[%s748] sm:$0xf] %vm730, %v746
          %v750 = vld [vmem:[#allocation11] sm:$0xf]
          %v751 = vld [vmem:[#allocation11 + $0x4] sm:$0xf]
          %v752 = vld [vmem:[#allocation11 + $0x8] sm:$0xf]
          %v753 = vld [vmem:[#allocation11 + $0xc] sm:$0xf]
          %v754 = vld [vmem:[#allocation13] sm:$0x1]
          %v756 = vlaneseq
          %v757 = vshrl.u32 %v756, 7
          %v758 = vsub.s32 0, %v757
          %v759 = vrot.slane %v754, %v758
          %v765 = vunpack.c.l.b16 %v750
          %v766 = vunpack.c.l.b16 %v751
          %v767 = vunpack.c.l.b16 %v752
          %v768 = vunpack.c.l.b16 %v753
          %v769 = vpack.c.b16 %v766, %v765
          %v770 = vpack.c.b16 %v768, %v767
          %773 = vmatprep.subr.bf16.mxu0 0
          %774 = vmatpush1.bf16.msra.mxu0 %v769
          %775 = vmatprep.subr.bf16.mxu0 0
          %776 = vmatpush1.bf16.msra.mxu0 %v770
          %777 = vmatprep.subr.bf16.mxu0 0
          %778 = vmatpush1.bf16.msra.mxu0 0
          %779 = vmatprep.subr.bf16.mxu0 0
          %780 = vmatpush1.bf16.msra.mxu0 0
          %781 = vmatprep.subr.bf16.mxu0 0
          %782 = vmatpush1.bf16.msra.mxu0 0
          %783 = vmatprep.subr.bf16.mxu0 0
          %784 = vmatpush1.bf16.msra.mxu0 0
          %785 = vmatprep.subr.bf16.mxu0 0
          %786 = vmatpush1.bf16.msra.mxu0 0
          %787 = vmatprep.subr.bf16.mxu0 0
          %788 = vmatpush1.bf16.msra.mxu0 0
          %789 = vmatprep.subr.bf16.mxu0 0
          %790 = vmatpush1.bf16.msra.mxu0 0
          %791 = vmatprep.subr.bf16.mxu0 0
          %792 = vmatpush1.bf16.msra.mxu0 0
          %793 = vmatprep.subr.bf16.mxu0 0
          %794 = vmatpush1.bf16.msra.mxu0 0
          %795 = vmatprep.subr.bf16.mxu0 0
          %796 = vmatpush1.bf16.msra.mxu0 0
          %797 = vmatprep.subr.bf16.mxu0 0
          %798 = vmatpush1.bf16.msra.mxu0 0
          %799 = vmatprep.subr.bf16.mxu0 0
          %800 = vmatpush1.bf16.msra.mxu0 0
          %801 = vmatprep.subr.bf16.mxu0 0
          %802 = vmatpush1.bf16.msra.mxu0 0
          %803 = vmatprep.subr.bf16.mxu0 0
          %804 = vmatpush1.bf16.msra.mxu0 0
          %805 = vmatprep.mubr.bf16.mxu0 0
          %806 = vmatmul.mubr.bf16.gmra.mrb[0].mxu0 %v687
          %v807 = vpop.f32.mrb[0].mxu0
          %v808 = vadd.f32 %v759, %v807
          %v809 = vpop.f32.mrb[0].mxu0
          %v810 = vpop.f32.mrb[0].mxu0
          %v811 = vpop.f32.mrb[0].mxu0
          %812 = vdwg.mxu0
          %v813 = vpack.c.bf16 %v808, %v808
          %814 = vst.msk [vmem:[#allocation3] sm:$0xf] %vm730, %v813
          %v816 = vunpack.c.l.b16 %v813
          %v817 = vpack.c.b16 %v816, %v816
          %818 = vrot.lane.b32.xlu0 %v817, 120
          %v819 = vpop.permute.xlu0 %818
          %s821 = scalar_lea.vmem [#allocation3], 4
          %822 = vst.msk [vmem:[%s821] sm:$0xf] %vm730, %v819
          %823 = vrot.lane.b32.xlu0 %v817, 112
          %v824 = vpop.permute.xlu0 %823
          %s826 = scalar_lea.vmem [#allocation3], 8
          %827 = vst.msk [vmem:[%s826] sm:$0xf] %vm730, %v824
          %828 = vrot.lane.b32.xlu0 %v817, 104
          %v829 = vpop.permute.xlu0 %828
          %s831 = scalar_lea.vmem [#allocation3], 12
          %832 = vst.msk [vmem:[%s831] sm:$0xf] %vm730, %v829
        $region108: #{tpu_custom_call.1} parent=79 // pred_fallthru
          _
        %v833 = vld [vmem:[%s629] sm:$0xff]
        %v834 = vld [vmem:[%s632] sm:$0x1]
        %v836 = vlaneseq
        %v837 = vshrl.u32 %v836, 7
        %v838 = vsub.s32 0, %v837
        %v839 = vrot.slane %v834, %v838
        %vm841 = vcmp.eq.f32.partialorder %v839, 0.0
        %vm842 = vcmask 261120
        %v843 = vsel %vm842, %v833, 0.0
        %844 = vadd.xlane.f32.xlu0 %v843
        %v845 = vpop.xlane.xlu0 %844
        %v846 = vrcp.pop 32.0
        %v847 = vmul.f32 %v845, %v846
        %v848 = vsub.f32 %v833, %v847
        %v849 = vmul.f32 %v848, %v848
        %v850 = vsel %vm842, %v849, 0.0
        %851 = vadd.xlane.f32.xlu0 %v850
        %v852 = vpop.xlane.xlu0 %851
        %v853 = vmul.f32 %v852, 0.032258064
        %v854 = vrsqrt.pop %v853
        %v855 = vmul.f32 %v853, %v854
        %vm856 = vcmp.eq.f32.partialorder %v853, inf
        %v857 = vsel %vm856, %v853, %v855
        %vm858 = vcmp.eq.f32.partialorder %v853, 0.0
        %v859 = vand.u32 %v853, 2147483648
        %v860 = vsel %vm858, %v859, %v857
        %v861 = vadd.f32 %v860, 1e-06
        %v862 = vrcp.pop %v861
        %v863 = vmul.f32 %v848, %v862
        %v864 = vpack.c.bf16 %v863, %v863
        %v865 = vld [vmem:[%s3] sm:$0xf]
        %v866 = vld [vmem:[%s3 + $0x4] sm:$0xf]
        %v867 = vld [vmem:[%s3 + $0x8] sm:$0xf]
        %v868 = vld [vmem:[%s3 + $0xc] sm:$0xf]
        %v869 = vld [vmem:[#allocation8] sm:$0x1]
        %v871 = vlaneseq
        %v872 = vshrl.u32 %v871, 7
        %v873 = vsub.s32 0, %v872
        %v874 = vrot.slane %v869, %v873
        %v880 = vunpack.c.l.b16 %v865
        %v881 = vunpack.c.l.b16 %v866
        %v882 = vunpack.c.l.b16 %v867
        %v883 = vunpack.c.l.b16 %v868
        %v884 = vpack.c.b16 %v881, %v880
        %v885 = vpack.c.b16 %v883, %v882
        %v889 = vsel %vm842, %v864, 0
        %891 = vmatprep.subr.bf16.mxu0 0
        %892 = vmatpush1.bf16.msra.mxu0 %v884
        %893 = vmatprep.subr.bf16.mxu0 0
        %894 = vmatpush1.bf16.msra.mxu0 %v885
        %895 = vmatprep.subr.bf16.mxu0 0
        %896 = vmatpush1.bf16.msra.mxu0 0
        %897 = vmatprep.subr.bf16.mxu0 0
        %898 = vmatpush1.bf16.msra.mxu0 0
        %899 = vmatprep.subr.bf16.mxu0 0
        %900 = vmatpush1.bf16.msra.mxu0 0
        %901 = vmatprep.subr.bf16.mxu0 0
        %902 = vmatpush1.bf16.msra.mxu0 0
        %903 = vmatprep.subr.bf16.mxu0 0
        %904 = vmatpush1.bf16.msra.mxu0 0
        %905 = vmatprep.subr.bf16.mxu0 0
        %906 = vmatpush1.bf16.msra.mxu0 0
        %907 = vmatprep.subr.bf16.mxu0 0
        %908 = vmatpush1.bf16.msra.mxu0 0
        %909 = vmatprep.subr.bf16.mxu0 0
        %910 = vmatpush1.bf16.msra.mxu0 0
        %911 = vmatprep.subr.bf16.mxu0 0
        %912 = vmatpush1.bf16.msra.mxu0 0
        %913 = vmatprep.subr.bf16.mxu0 0
        %914 = vmatpush1.bf16.msra.mxu0 0
        %915 = vmatprep.subr.bf16.mxu0 0
        %916 = vmatpush1.bf16.msra.mxu0 0
        %917 = vmatprep.subr.bf16.mxu0 0
        %918 = vmatpush1.bf16.msra.mxu0 0
        %919 = vmatprep.subr.bf16.mxu0 0
        %920 = vmatpush1.bf16.msra.mxu0 0
        %921 = vmatprep.subr.bf16.mxu0 0
        %922 = vmatpush1.bf16.msra.mxu0 0
        %923 = vmatprep.mubr.bf16.mxu0 0
        %924 = vmatmul.mubr.bf16.gmra.mrb[0].mxu0 %v889
        %v925 = vpop.f32.mrb[0].mxu0
        %v926 = vadd.f32 %v874, %v925
        %v927 = vpop.f32.mrb[0].mxu0
        %v928 = vpop.f32.mrb[0].mxu0
        %v929 = vpop.f32.mrb[0].mxu0
        %930 = vdwg.mxu0
        %v931 = vpack.c.bf16 %v926, %v926
        %v932 = vld [vmem:[#allocation2] sm:$0xf]
        %v933 = vld [vmem:[#allocation3] sm:$0xf]
        %vm934 = vcmask 64512
        %v936 = vsel %vm934, %v931, 0
        %v939 = vsel %vm934, %v932, 0
        %941 = vmatprep.subr.bf16.mxu0 0
        %942 = vmatpush1.bf16.xpose.msra.mxu0 %v939
        %943 = vmatprep.subr.bf16.mxu0 0
        %944 = vmatpush1.bf16.xpose.msra.mxu0 0
        %945 = vmatprep.subr.bf16.mxu0 0
        %946 = vmatpush1.bf16.xpose.msra.mxu0 0
        %947 = vmatprep.subr.bf16.mxu0 0
        %948 = vmatpush1.bf16.xpose.msra.mxu0 0
        %949 = vmatprep.subr.bf16.mxu0 0
        %950 = vmatpush1.bf16.xpose.msra.mxu0 0
        %951 = vmatprep.subr.bf16.mxu0 0
        %952 = vmatpush1.bf16.xpose.msra.mxu0 0
        %953 = vmatprep.subr.bf16.mxu0 0
        %954 = vmatpush1.bf16.xpose.msra.mxu0 0
        %955 = vmatprep.subr.bf16.mxu0 0
        %956 = vmatpush1.bf16.xpose.msra.mxu0 0
        %957 = vmatprep.subr.bf16.mxu0 0
        %958 = vmatpush1.bf16.xpose.msra.mxu0 0
        %959 = vmatprep.subr.bf16.mxu0 0
        %960 = vmatpush1.bf16.xpose.msra.mxu0 0
        %961 = vmatprep.subr.bf16.mxu0 0
        %962 = vmatpush1.bf16.xpose.msra.mxu0 0
        %963 = vmatprep.subr.bf16.mxu0 0
        %964 = vmatpush1.bf16.xpose.msra.mxu0 0
        %965 = vmatprep.subr.bf16.mxu0 0
        %966 = vmatpush1.bf16.xpose.msra.mxu0 0
        %967 = vmatprep.subr.bf16.mxu0 0
        %968 = vmatpush1.bf16.xpose.msra.mxu0 0
        %969 = vmatprep.subr.bf16.mxu0 0
        %970 = vmatpush1.bf16.xpose.msra.mxu0 0
        %971 = vmatprep.subr.bf16.mxu0 0
        %972 = vmatpush1.bf16.xpose.msra.mxu0 0
        %973 = vmatprep.mubr.bf16.mxu0 0
        %974 = vmatmul.mubr.bf16.gmra.mrb[0].mxu0 %v936
        %v975 = vpop.f32.mrb[0].mxu0
        %v976 = vadd.f32 0.0, %v975
        %v977 = vpop.f32.mrb[0].mxu0
        %v978 = vpop.f32.mrb[0].mxu0
        %v979 = vpop.f32.mrb[0].mxu0
        %980 = vdwg.mxu0
        %v981 = vsel %vm841, -1e+09, %v976
        %v982 = vsel %vm934, %v981, -inf
        %983 = vmax.xlane.f32.xlu0 %v982
        %v984 = vpop.xlane.xlu0 %983
        %v985 = vsub.f32 %v981, %v984
        %v986 = vmul.f32 %v985, 1.442695
        %v987 = vpow.pop %v986
        %v988 = vsel %vm934, %v987, 0.0
        %989 = vadd.xlane.f32.xlu0 %v988
        %v990 = vpop.xlane.xlu0 %989
        %v991 = vpack.c.bf16 %v987, %v987
        %v992 = vrcp.pop %v990
        %v994 = vsel %vm934, %v991, 0
        %vm996 = vcmask 1043456
        %v998 = vsel %vm996, %v933, 0
        %1000 = vmatprep.subr.bf16.mxu0 0
        %1001 = vmatpush1.bf16.msra.mxu0 %v998
        %1002 = vmatprep.subr.bf16.mxu0 0
        %1003 = vmatpush1.bf16.msra.mxu0 0
        %1004 = vmatprep.subr.bf16.mxu0 0
        %1005 = vmatpush1.bf16.msra.mxu0 0
        %1006 = vmatprep.subr.bf16.mxu0 0
        %1007 = vmatpush1.bf16.msra.mxu0 0
        %1008 = vmatprep.subr.bf16.mxu0 0
        %1009 = vmatpush1.bf16.msra.mxu0 0
        %1010 = vmatprep.subr.bf16.mxu0 0
        %1011 = vmatpush1.bf16.msra.mxu0 0
        %1012 = vmatprep.subr.bf16.mxu0 0
        %1013 = vmatpush1.bf16.msra.mxu0 0
        %1014 = vmatprep.subr.bf16.mxu0 0
        %1015 = vmatpush1.bf16.msra.mxu0 0
        %1016 = vmatprep.subr.bf16.mxu0 0
        %1017 = vmatpush1.bf16.msra.mxu0 0
        %1018 = vmatprep.subr.bf16.mxu0 0
        %1019 = vmatpush1.bf16.msra.mxu0 0
        %1020 = vmatprep.subr.bf16.mxu0 0
        %1021 = vmatpush1.bf16.msra.mxu0 0
        %1022 = vmatprep.subr.bf16.mxu0 0
        %1023 = vmatpush1.bf16.msra.mxu0 0
        %1024 = vmatprep.subr.bf16.mxu0 0
        %1025 = vmatpush1.bf16.msra.mxu0 0
        %1026 = vmatprep.subr.bf16.mxu0 0
        %1027 = vmatpush1.bf16.msra.mxu0 0
        %1028 = vmatprep.subr.bf16.mxu0 0
        %1029 = vmatpush1.bf16.msra.mxu0 0
        %1030 = vmatprep.subr.bf16.mxu0 0
        %1031 = vmatpush1.bf16.msra.mxu0 0
        %1032 = vmatprep.mubr.bf16.mxu0 0
        %1033 = vmatmul.mubr.bf16.gmra.mrb[0].mxu0 %v994
        %v1034 = vpop.f32.mrb[0].mxu0
        %v1035 = vadd.f32 0.0, %v1034
        %v1036 = vpop.f32.mrb[0].mxu0
        %v1037 = vpop.f32.mrb[0].mxu0
        %v1038 = vpop.f32.mrb[0].mxu0
        %1039 = vdwg.mxu0
        %v1040 = vmul.f32 %v1035, %v992
        %v1041 = vpack.c.bf16 %v1040, %v1040
        %vm1042 = vcmask 60416
        %1043 = vst.msk [vmem:[#allocation4] sm:$0xf] %vm1042, %v1041
        %s1044 = scalar_lea.vmem [#allocation2], 4
        %v1045 = vld [vmem:[%s1044] sm:$0xf]
        %s1046 = scalar_lea.vmem [#allocation3], 4
        %v1047 = vld [vmem:[%s1046] sm:$0xf]
        %1049 = vrot.lane.b32.xlu0 %v931, 120
        %v1050 = vpop.permute.xlu0 %1049
        %v1052 = vsel %vm934, %v1050, 0
        %v1055 = vsel %vm934, %v1045, 0
        %1057 = vmatprep.subr.bf16.mxu0 0
        %1058 = vmatpush1.bf16.xpose.msra.mxu0 %v1055
        %1059 = vmatprep.subr.bf16.mxu0 0
        %1060 = vmatpush1.bf16.xpose.msra.mxu0 0
        %1061 = vmatprep.subr.bf16.mxu0 0
        %1062 = vmatpush1.bf16.xpose.msra.mxu0 0
        %1063 = vmatprep.subr.bf16.mxu0 0
        %1064 = vmatpush1.bf16.xpose.msra.mxu0 0
        %1065 = vmatprep.subr.bf16.mxu0 0
        %1066 = vmatpush1.bf16.xpose.msra.mxu0 0
        %1067 = vmatprep.subr.bf16.mxu0 0
        %1068 = vmatpush1.bf16.xpose.msra.mxu0 0
        %1069 = vmatprep.subr.bf16.mxu0 0
        %1070 = vmatpush1.bf16.xpose.msra.mxu0 0
        %1071 = vmatprep.subr.bf16.mxu0 0
        %1072 = vmatpush1.bf16.xpose.msra.mxu0 0
        %1073 = vmatprep.subr.bf16.mxu0 0
        %1074 = vmatpush1.bf16.xpose.msra.mxu0 0
        %1075 = vmatprep.subr.bf16.mxu0 0
        %1076 = vmatpush1.bf16.xpose.msra.mxu0 0
        %1077 = vmatprep.subr.bf16.mxu0 0
        %1078 = vmatpush1.bf16.xpose.msra.mxu0 0
        %1079 = vmatprep.subr.bf16.mxu0 0
        %1080 = vmatpush1.bf16.xpose.msra.mxu0 0
        %1081 = vmatprep.subr.bf16.mxu0 0
        %1082 = vmatpush1.bf16.xpose.msra.mxu0 0
        %1083 = vmatprep.subr.bf16.mxu0 0
        %1084 = vmatpush1.bf16.xpose.msra.mxu0 0
        %1085 = vmatprep.subr.bf16.mxu0 0
        %1086 = vmatpush1.bf16.xpose.msra.mxu0 0
        %1087 = vmatprep.subr.bf16.mxu0 0
        %1088 = vmatpush1.bf16.xpose.msra.mxu0 0
        %1089 = vmatprep.mubr.bf16.mxu0 0
        %1090 = vmatmul.mubr.bf16.gmra.mrb[0].mxu0 %v1052
        %v1091 = vpop.f32.mrb[0].mxu0
        %v1092 = vadd.f32 0.0, %v1091
        %v1093 = vpop.f32.mrb[0].mxu0
        %v1094 = vpop.f32.mrb[0].mxu0
        %v1095 = vpop.f32.mrb[0].mxu0
        %1096 = vdwg.mxu0
        %v1097 = vsel %vm841, -1e+09, %v1092
        %v1098 = vsel %vm934, %v1097, -inf
        %1099 = vmax.xlane.f32.xlu0 %v1098
        %v1100 = vpop.xlane.xlu0 %1099
        %v1101 = vsub.f32 %v1097, %v1100
        %v1102 = vmul.f32 %v1101, 1.442695
        %v1103 = vpow.pop %v1102
        %v1104 = vsel %vm934, %v1103, 0.0
        %1105 = vadd.xlane.f32.xlu0 %v1104
        %v1106 = vpop.xlane.xlu0 %1105
        %v1107 = vpack.c.bf16 %v1103, %v1103
        %v1108 = vrcp.pop %v1106
        %v1110 = vsel %vm934, %v1107, 0
        %v1113 = vsel %vm996, %v1047, 0
        %1115 = vmatprep.subr.bf16.mxu0 0
        %1116 = vmatpush1.bf16.msra.mxu0 %v1113
        %1117 = vmatprep.subr.bf16.mxu0 0
        %1118 = vmatpush1.bf16.msra.mxu0 0
        %1119 = vmatprep.subr.bf16.mxu0 0
        %1120 = vmatpush1.bf16.msra.mxu0 0
        %1121 = vmatprep.subr.bf16.mxu0 0
        %1122 = vmatpush1.bf16.msra.mxu0 0
        %1123 = vmatprep.subr.bf16.mxu0 0
        %1124 = vmatpush1.bf16.msra.mxu0 0
        %1125 = vmatprep.subr.bf16.mxu0 0
        %1126 = vmatpush1.bf16.msra.mxu0 0
        %1127 = vmatprep.subr.bf16.mxu0 0
        %1128 = vmatpush1.bf16.msra.mxu0 0
        %1129 = vmatprep.subr.bf16.mxu0 0
        %1130 = vmatpush1.bf16.msra.mxu0 0
        %1131 = vmatprep.subr.bf16.mxu0 0
        %1132 = vmatpush1.bf16.msra.mxu0 0
        %1133 = vmatprep.subr.bf16.mxu0 0
        %1134 = vmatpush1.bf16.msra.mxu0 0
        %1135 = vmatprep.subr.bf16.mxu0 0
        %1136 = vmatpush1.bf16.msra.mxu0 0
        %1137 = vmatprep.subr.bf16.mxu0 0
        %1138 = vmatpush1.bf16.msra.mxu0 0
        %1139 = vmatprep.subr.bf16.mxu0 0
        %1140 = vmatpush1.bf16.msra.mxu0 0
        %1141 = vmatprep.subr.bf16.mxu0 0
        %1142 = vmatpush1.bf16.msra.mxu0 0
        %1143 = vmatprep.subr.bf16.mxu0 0
        %1144 = vmatpush1.bf16.msra.mxu0 0
        %1145 = vmatprep.subr.bf16.mxu0 0
        %1146 = vmatpush1.bf16.msra.mxu0 0
        %1147 = vmatprep.mubr.bf16.mxu0 0
        %1148 = vmatmul.mubr.bf16.gmra.mrb[0].mxu0 %v1110
        %v1149 = vpop.f32.mrb[0].mxu0
        %v1150 = vadd.f32 0.0, %v1149
        %v1151 = vpop.f32.mrb[0].mxu0
        %v1152 = vpop.f32.mrb[0].mxu0
        %v1153 = vpop.f32.mrb[0].mxu0
        %1154 = vdwg.mxu0
        %v1155 = vmul.f32 %v1150, %v1108
        %v1156 = vpack.c.bf16 %v1155, %v1155
        %v1158 = vunpack.c.l.b16 %v1156
        %v1159 = vpack.c.b16 %v1158, %v1158
        %1160 = vrot.lane.b32.xlu0 %v1159, 8
        %v1161 = vpop.permute.xlu0 %1160
        %vm1163 = vcmask 126016
        %1164 = vst.msk [vmem:[#allocation4] sm:$0xf] %vm1163, %v1161
        %s1165 = scalar_lea.vmem [#allocation2], 8
        %v1166 = vld [vmem:[%s1165] sm:$0xf]
        %s1167 = scalar_lea.vmem [#allocation3], 8
        %v1168 = vld [vmem:[%s1167] sm:$0xf]
        %1169 = vrot.lane.b32.xlu0 %v931, 112
        %v1170 = vpop.permute.xlu0 %1169
        %v1172 = vsel %vm934, %v1170, 0
        %v1175 = vsel %vm934, %v1166, 0
        %1177 = vmatprep.subr.bf16.mxu0 0
        %1178 = vmatpush1.bf16.xpose.msra.mxu0 %v1175
        %1179 = vmatprep.subr.bf16.mxu0 0
        %1180 = vmatpush1.bf16.xpose.msra.mxu0 0
        %1181 = vmatprep.subr.bf16.mxu0 0
        %1182 = vmatpush1.bf16.xpose.msra.mxu0 0
        %1183 = vmatprep.subr.bf16.mxu0 0
        %1184 = vmatpush1.bf16.xpose.msra.mxu0 0
        %1185 = vmatprep.subr.bf16.mxu0 0
        %1186 = vmatpush1.bf16.xpose.msra.mxu0 0
        %1187 = vmatprep.subr.bf16.mxu0 0
        %1188 = vmatpush1.bf16.xpose.msra.mxu0 0
        %1189 = vmatprep.subr.bf16.mxu0 0
        %1190 = vmatpush1.bf16.xpose.msra.mxu0 0
        %1191 = vmatprep.subr.bf16.mxu0 0
        %1192 = vmatpush1.bf16.xpose.msra.mxu0 0
        %1193 = vmatprep.subr.bf16.mxu0 0
        %1194 = vmatpush1.bf16.xpose.msra.mxu0 0
        %1195 = vmatprep.subr.bf16.mxu0 0
        %1196 = vmatpush1.bf16.xpose.msra.mxu0 0
        %1197 = vmatprep.subr.bf16.mxu0 0
        %1198 = vmatpush1.bf16.xpose.msra.mxu0 0
        %1199 = vmatprep.subr.bf16.mxu0 0
        %1200 = vmatpush1.bf16.xpose.msra.mxu0 0
        %1201 = vmatprep.subr.bf16.mxu0 0
        %1202 = vmatpush1.bf16.xpose.msra.mxu0 0
        %1203 = vmatprep.subr.bf16.mxu0 0
        %1204 = vmatpush1.bf16.xpose.msra.mxu0 0
        %1205 = vmatprep.subr.bf16.mxu0 0
        %1206 = vmatpush1.bf16.xpose.msra.mxu0 0
        %1207 = vmatprep.subr.bf16.mxu0 0
        %1208 = vmatpush1.bf16.xpose.msra.mxu0 0
        %1209 = vmatprep.mubr.bf16.mxu0 0
        %1210 = vmatmul.mubr.bf16.gmra.mrb[0].mxu0 %v1172
        %v1211 = vpop.f32.mrb[0].mxu0
        %v1212 = vadd.f32 0.0, %v1211
        %v1213 = vpop.f32.mrb[0].mxu0
        %v1214 = vpop.f32.mrb[0].mxu0
        %v1215 = vpop.f32.mrb[0].mxu0
        %1216 = vdwg.mxu0
        %v1217 = vsel %vm841, -1e+09, %v1212
        %v1218 = vsel %vm934, %v1217, -inf
        %1219 = vmax.xlane.f32.xlu0 %v1218
        %v1220 = vpop.xlane.xlu0 %1219
        %v1221 = vsub.f32 %v1217, %v1220
        %v1222 = vmul.f32 %v1221, 1.442695
        %v1223 = vpow.pop %v1222
        %v1224 = vsel %vm934, %v1223, 0.0
        %1225 = vadd.xlane.f32.xlu0 %v1224
        %v1226 = vpop.xlane.xlu0 %1225
        %v1227 = vpack.c.bf16 %v1223, %v1223
        %v1228 = vrcp.pop %v1226
        %v1230 = vsel %vm934, %v1227, 0
        %v1233 = vsel %vm996, %v1168, 0
        %1235 = vmatprep.subr.bf16.mxu0 0
        %1236 = vmatpush1.bf16.msra.mxu0 %v1233
        %1237 = vmatprep.subr.bf16.mxu0 0
        %1238 = vmatpush1.bf16.msra.mxu0 0
        %1239 = vmatprep.subr.bf16.mxu0 0
        %1240 = vmatpush1.bf16.msra.mxu0 0
        %1241 = vmatprep.subr.bf16.mxu0 0
        %1242 = vmatpush1.bf16.msra.mxu0 0
        %1243 = vmatprep.subr.bf16.mxu0 0
        %1244 = vmatpush1.bf16.msra.mxu0 0
        %1245 = vmatprep.subr.bf16.mxu0 0
        %1246 = vmatpush1.bf16.msra.mxu0 0
        %1247 = vmatprep.subr.bf16.mxu0 0
        %1248 = vmatpush1.bf16.msra.mxu0 0
        %1249 = vmatprep.subr.bf16.mxu0 0
        %1250 = vmatpush1.bf16.msra.mxu0 0
        %1251 = vmatprep.subr.bf16.mxu0 0
        %1252 = vmatpush1.bf16.msra.mxu0 0
        %1253 = vmatprep.subr.bf16.mxu0 0
        %1254 = vmatpush1.bf16.msra.mxu0 0
        %1255 = vmatprep.subr.bf16.mxu0 0
        %1256 = vmatpush1.bf16.msra.mxu0 0
        %1257 = vmatprep.subr.bf16.mxu0 0
        %1258 = vmatpush1.bf16.msra.mxu0 0
        %1259 = vmatprep.subr.bf16.mxu0 0
        %1260 = vmatpush1.bf16.msra.mxu0 0
        %1261 = vmatprep.subr.bf16.mxu0 0
        %1262 = vmatpush1.bf16.msra.mxu0 0
        %1263 = vmatprep.subr.bf16.mxu0 0
        %1264 = vmatpush1.bf16.msra.mxu0 0
        %1265 = vmatprep.subr.bf16.mxu0 0
        %1266 = vmatpush1.bf16.msra.mxu0 0
        %1267 = vmatprep.mubr.bf16.mxu0 0
        %1268 = vmatmul.mubr.bf16.gmra.mrb[0].mxu0 %v1230
        %v1269 = vpop.f32.mrb[0].mxu0
        %v1270 = vadd.f32 0.0, %v1269
        %v1271 = vpop.f32.mrb[0].mxu0
        %v1272 = vpop.f32.mrb[0].mxu0
        %v1273 = vpop.f32.mrb[0].mxu0
        %1274 = vdwg.mxu0
        %v1275 = vmul.f32 %v1270, %v1228
        %v1276 = vpack.c.bf16 %v1275, %v1275
        %v1278 = vunpack.c.l.b16 %v1276
        %v1279 = vpack.c.b16 %v1278, %v1278
        %1280 = vrot.lane.b32.xlu0 %v1279, 16
        %v1281 = vpop.permute.xlu0 %1280
        %vm1283 = vcmask 191616
        %1284 = vst.msk [vmem:[#allocation4] sm:$0xf] %vm1283, %v1281
        %s1285 = scalar_lea.vmem [#allocation2], 12
        %v1286 = vld [vmem:[%s1285] sm:$0xf]
        %s1287 = scalar_lea.vmem [#allocation3], 12
        %v1288 = vld [vmem:[%s1287] sm:$0xf]
        %1289 = vrot.lane.b32.xlu0 %v931, 104
        %v1290 = vpop.permute.xlu0 %1289
        %v1292 = vsel %vm934, %v1290, 0
        %v1295 = vsel %vm934, %v1286, 0
        %1297 = vmatprep.subr.bf16.mxu0 0
        %1298 = vmatpush1.bf16.xpose.msra.mxu0 %v1295
        %1299 = vmatprep.subr.bf16.mxu0 0
        %1300 = vmatpush1.bf16.xpose.msra.mxu0 0
        %1301 = vmatprep.subr.bf16.mxu0 0
        %1302 = vmatpush1.bf16.xpose.msra.mxu0 0
        %1303 = vmatprep.subr.bf16.mxu0 0
        %1304 = vmatpush1.bf16.xpose.msra.mxu0 0
        %1305 = vmatprep.subr.bf16.mxu0 0
        %1306 = vmatpush1.bf16.xpose.msra.mxu0 0
        %1307 = vmatprep.subr.bf16.mxu0 0
        %1308 = vmatpush1.bf16.xpose.msra.mxu0 0
        %1309 = vmatprep.subr.bf16.mxu0 0
        %1310 = vmatpush1.bf16.xpose.msra.mxu0 0
        %1311 = vmatprep.subr.bf16.mxu0 0
        %1312 = vmatpush1.bf16.xpose.msra.mxu0 0
        %1313 = vmatprep.subr.bf16.mxu0 0
        %1314 = vmatpush1.bf16.xpose.msra.mxu0 0
        %1315 = vmatprep.subr.bf16.mxu0 0
        %1316 = vmatpush1.bf16.xpose.msra.mxu0 0
        %1317 = vmatprep.subr.bf16.mxu0 0
        %1318 = vmatpush1.bf16.xpose.msra.mxu0 0
        %1319 = vmatprep.subr.bf16.mxu0 0
        %1320 = vmatpush1.bf16.xpose.msra.mxu0 0
        %1321 = vmatprep.subr.bf16.mxu0 0
        %1322 = vmatpush1.bf16.xpose.msra.mxu0 0
        %1323 = vmatprep.subr.bf16.mxu0 0
        %1324 = vmatpush1.bf16.xpose.msra.mxu0 0
        %1325 = vmatprep.subr.bf16.mxu0 0
        %1326 = vmatpush1.bf16.xpose.msra.mxu0 0
        %1327 = vmatprep.subr.bf16.mxu0 0
        %1328 = vmatpush1.bf16.xpose.msra.mxu0 0
        %1329 = vmatprep.mubr.bf16.mxu0 0
        %1330 = vmatmul.mubr.bf16.gmra.mrb[0].mxu0 %v1292
        %v1331 = vpop.f32.mrb[0].mxu0
        %v1332 = vadd.f32 0.0, %v1331
        %v1333 = vpop.f32.mrb[0].mxu0
        %v1334 = vpop.f32.mrb[0].mxu0
        %v1335 = vpop.f32.mrb[0].mxu0
        %1336 = vdwg.mxu0
        %v1337 = vsel %vm841, -1e+09, %v1332
        %v1338 = vsel %vm934, %v1337, -inf
        %1339 = vmax.xlane.f32.xlu0 %v1338
        %v1340 = vpop.xlane.xlu0 %1339
        %v1341 = vsub.f32 %v1337, %v1340
        %v1342 = vmul.f32 %v1341, 1.442695
        %v1343 = vpow.pop %v1342
        %v1344 = vsel %vm934, %v1343, 0.0
        %1345 = vadd.xlane.f32.xlu0 %v1344
        %v1346 = vpop.xlane.xlu0 %1345
        %v1347 = vpack.c.bf16 %v1343, %v1343
        %v1348 = vrcp.pop %v1346
        %v1350 = vsel %vm934, %v1347, 0
        %v1353 = vsel %vm996, %v1288, 0
        %1355 = vmatprep.subr.bf16.mxu0 0
        %1356 = vmatpush1.bf16.msra.mxu0 %v1353
        %1357 = vmatprep.subr.bf16.mxu0 0
        %1358 = vmatpush1.bf16.msra.mxu0 0
        %1359 = vmatprep.subr.bf16.mxu0 0
        %1360 = vmatpush1.bf16.msra.mxu0 0
        %1361 = vmatprep.subr.bf16.mxu0 0
        %1362 = vmatpush1.bf16.msra.mxu0 0
        %1363 = vmatprep.subr.bf16.mxu0 0
        %1364 = vmatpush1.bf16.msra.mxu0 0
        %1365 = vmatprep.subr.bf16.mxu0 0
        %1366 = vmatpush1.bf16.msra.mxu0 0
        %1367 = vmatprep.subr.bf16.mxu0 0
        %1368 = vmatpush1.bf16.msra.mxu0 0
        %1369 = vmatprep.subr.bf16.mxu0 0
        %1370 = vmatpush1.bf16.msra.mxu0 0
        %1371 = vmatprep.subr.bf16.mxu0 0
        %1372 = vmatpush1.bf16.msra.mxu0 0
        %1373 = vmatprep.subr.bf16.mxu0 0
        %1374 = vmatpush1.bf16.msra.mxu0 0
        %1375 = vmatprep.subr.bf16.mxu0 0
        %1376 = vmatpush1.bf16.msra.mxu0 0
        %1377 = vmatprep.subr.bf16.mxu0 0
        %1378 = vmatpush1.bf16.msra.mxu0 0
        %1379 = vmatprep.subr.bf16.mxu0 0
        %1380 = vmatpush1.bf16.msra.mxu0 0
        %1381 = vmatprep.subr.bf16.mxu0 0
        %1382 = vmatpush1.bf16.msra.mxu0 0
        %1383 = vmatprep.subr.bf16.mxu0 0
        %1384 = vmatpush1.bf16.msra.mxu0 0
        %1385 = vmatprep.subr.bf16.mxu0 0
        %1386 = vmatpush1.bf16.msra.mxu0 0
        %1387 = vmatprep.mubr.bf16.mxu0 0
        %1388 = vmatmul.mubr.bf16.gmra.mrb[0].mxu0 %v1350
        %v1389 = vpop.f32.mrb[0].mxu0
        %v1390 = vadd.f32 0.0, %v1389
        %v1391 = vpop.f32.mrb[0].mxu0
        %v1392 = vpop.f32.mrb[0].mxu0
        %v1393 = vpop.f32.mrb[0].mxu0
        %1394 = vdwg.mxu0
        %v1395 = vmul.f32 %v1390, %v1348
        %v1396 = vpack.c.bf16 %v1395, %v1395
        %v1398 = vunpack.c.l.b16 %v1396
        %v1399 = vpack.c.b16 %v1398, %v1398
        %1400 = vrot.lane.b32.xlu0 %v1399, 24
        %v1401 = vpop.permute.xlu0 %1400
        %vm1403 = vcmask 257216
        %1404 = vst.msk [vmem:[#allocation4] sm:$0xf] %vm1403, %v1401
        %v1405 = vld [vmem:[#allocation4] sm:$0xf]
        %v1406 = vld [vmem:[%s9] sm:$0xf]
        %v1407 = vld [vmem:[%s9 + $0x4] sm:$0xf]
        %v1408 = vld [vmem:[%s9 + $0x8] sm:$0xf]
        %v1409 = vld [vmem:[%s9 + $0xc] sm:$0xf]
        %v1410 = vld [vmem:[%s10] sm:$0x1]
        %v1412 = vlaneseq
        %v1413 = vshrl.u32 %v1412, 7
        %v1414 = vsub.s32 0, %v1413
        %v1415 = vrot.slane %v1410, %v1414
        %v1421 = vunpack.c.l.b16 %v1406
        %v1422 = vunpack.c.l.b16 %v1407
        %v1423 = vunpack.c.l.b16 %v1408
        %v1424 = vunpack.c.l.b16 %v1409
        %v1425 = vpack.c.b16 %v1422, %v1421
        %v1426 = vpack.c.b16 %v1424, %v1423
        %v1430 = vsel %vm842, %v1405, 0
        %1432 = vmatprep.subr.bf16.mxu0 0
        %1433 = vmatpush1.bf16.msra.mxu0 %v1425
        %1434 = vmatprep.subr.bf16.mxu0 0
        %1435 = vmatpush1.bf16.msra.mxu0 %v1426
        %1436 = vmatprep.subr.bf16.mxu0 0
        %1437 = vmatpush1.bf16.msra.mxu0 0
        %1438 = vmatprep.subr.bf16.mxu0 0
        %1439 = vmatpush1.bf16.msra.mxu0 0
        %1440 = vmatprep.subr.bf16.mxu0 0
        %1441 = vmatpush1.bf16.msra.mxu0 0
        %1442 = vmatprep.subr.bf16.mxu0 0
        %1443 = vmatpush1.bf16.msra.mxu0 0
        %1444 = vmatprep.subr.bf16.mxu0 0
        %1445 = vmatpush1.bf16.msra.mxu0 0
        %1446 = vmatprep.subr.bf16.mxu0 0
        %1447 = vmatpush1.bf16.msra.mxu0 0
        %1448 = vmatprep.subr.bf16.mxu0 0
        %1449 = vmatpush1.bf16.msra.mxu0 0
        %1450 = vmatprep.subr.bf16.mxu0 0
        %1451 = vmatpush1.bf16.msra.mxu0 0
        %1452 = vmatprep.subr.bf16.mxu0 0
        %1453 = vmatpush1.bf16.msra.mxu0 0
        %1454 = vmatprep.subr.bf16.mxu0 0
        %1455 = vmatpush1.bf16.msra.mxu0 0
        %1456 = vmatprep.subr.bf16.mxu0 0
        %1457 = vmatpush1.bf16.msra.mxu0 0
        %1458 = vmatprep.subr.bf16.mxu0 0
        %1459 = vmatpush1.bf16.msra.mxu0 0
        %1460 = vmatprep.subr.bf16.mxu0 0
        %1461 = vmatpush1.bf16.msra.mxu0 0
        %1462 = vmatprep.subr.bf16.mxu0 0
        %1463 = vmatpush1.bf16.msra.mxu0 0
        %1464 = vmatprep.mubr.bf16.mxu0 0
        %1465 = vmatmul.mubr.bf16.gmra.mrb[0].mxu0 %v1430
        %v1466 = vpop.f32.mrb[0].mxu0
        %v1467 = vadd.f32 %v1415, %v1466
        %v1468 = vpop.f32.mrb[0].mxu0
        %v1469 = vpop.f32.mrb[0].mxu0
        %v1470 = vpop.f32.mrb[0].mxu0
        %1471 = vdwg.mxu0
        %v1472 = vadd.f32 %v833, %v1467
        %v1473 = vsel %vm842, %v1472, 0.0
        %1474 = vadd.xlane.f32.xlu0 %v1473
        %v1475 = vpop.xlane.xlu0 %1474
        %v1476 = vmul.f32 %v1475, %v846
        %v1477 = vsub.f32 %v1472, %v1476
        %v1478 = vmul.f32 %v1477, %v1477
        %v1479 = vsel %vm842, %v1478, 0.0
        %1480 = vadd.xlane.f32.xlu0 %v1479
        %v1481 = vpop.xlane.xlu0 %1480
        %v1482 = vmul.f32 %v1481, 0.032258064
        %v1483 = vrsqrt.pop %v1482
        %v1484 = vmul.f32 %v1482, %v1483
        %vm1485 = vcmp.eq.f32.partialorder %v1482, inf
        %v1486 = vsel %vm1485, %v1482, %v1484
        %vm1487 = vcmp.eq.f32.partialorder %v1482, 0.0
        %v1488 = vand.u32 %v1482, 2147483648
        %v1489 = vsel %vm1487, %v1488, %v1486
        %v1490 = vadd.f32 %v1489, 1e-06
        %v1491 = vrcp.pop %v1490
        %v1492 = vmul.f32 %v1477, %v1491
        %v1493 = vpack.c.bf16 %v1492, %v1492
        %v1494 = vld [vmem:[#allocation14] sm:$0xf]
        %v1495 = vld [vmem:[#allocation14 + $0x4] sm:$0xf]
        %v1496 = vld [vmem:[#allocation14 + $0x8] sm:$0xf]
        %v1497 = vld [vmem:[#allocation14 + $0xc] sm:$0xf]
        %v1498 = vld [vmem:[%s12] sm:$0x1]
        %v1500 = vlaneseq
        %v1501 = vshrl.u32 %v1500, 7
        %v1502 = vsub.s32 0, %v1501
        %v1503 = vrot.slane %v1498, %v1502
        %v1509 = vunpack.c.l.b16 %v1494
        %v1510 = vunpack.c.l.b16 %v1495
        %v1511 = vunpack.c.l.b16 %v1496
        %v1512 = vunpack.c.l.b16 %v1497
        %v1513 = vpack.c.b16 %v1510, %v1509
        %v1514 = vpack.c.b16 %v1512, %v1511
        %v1518 = vsel %vm842, %v1493, 0
        %1520 = vmatprep.subr.bf16.mxu0 0
        %1521 = vmatpush1.bf16.msra.mxu0 %v1513
        %1522 = vmatprep.subr.bf16.mxu0 0
        %1523 = vmatpush1.bf16.msra.mxu0 %v1514
        %1524 = vmatprep.subr.bf16.mxu0 0
        %1525 = vmatpush1.bf16.msra.mxu0 0
        %1526 = vmatprep.subr.bf16.mxu0 0
        %1527 = vmatpush1.bf16.msra.mxu0 0
        %1528 = vmatprep.subr.bf16.mxu0 0
        %1529 = vmatpush1.bf16.msra.mxu0 0
        %1530 = vmatprep.subr.bf16.mxu0 0
        %1531 = vmatpush1.bf16.msra.mxu0 0
        %1532 = vmatprep.subr.bf16.mxu0 0
        %1533 = vmatpush1.bf16.msra.mxu0 0
        %1534 = vmatprep.subr.bf16.mxu0 0
        %1535 = vmatpush1.bf16.msra.mxu0 0
        %1536 = vmatprep.subr.bf16.mxu0 0
        %1537 = vmatpush1.bf16.msra.mxu0 0
        %1538 = vmatprep.subr.bf16.mxu0 0
        %1539 = vmatpush1.bf16.msra.mxu0 0
        %1540 = vmatprep.subr.bf16.mxu0 0
        %1541 = vmatpush1.bf16.msra.mxu0 0
        %1542 = vmatprep.subr.bf16.mxu0 0
        %1543 = vmatpush1.bf16.msra.mxu0 0
        %1544 = vmatprep.subr.bf16.mxu0 0
        %1545 = vmatpush1.bf16.msra.mxu0 0
        %1546 = vmatprep.subr.bf16.mxu0 0
        %1547 = vmatpush1.bf16.msra.mxu0 0
        %1548 = vmatprep.subr.bf16.mxu0 0
        %1549 = vmatpush1.bf16.msra.mxu0 0
        %1550 = vmatprep.subr.bf16.mxu0 0
        %1551 = vmatpush1.bf16.msra.mxu0 0
        %1552 = vmatprep.mubr.bf16.mxu0 0
        %1553 = vmatmul.mubr.bf16.gmra.mrb[0].mxu0 %v1518
        %v1554 = vpop.f32.mrb[0].mxu0
        %v1555 = vadd.f32 %v1503, %v1554
        %v1556 = vpop.f32.mrb[0].mxu0
        %v1557 = vpop.f32.mrb[0].mxu0
        %v1558 = vpop.f32.mrb[0].mxu0
        %1559 = vdwg.mxu0
        %v1560 = vmax.f32 %v1555, 0.0
        %v1561 = vpack.c.bf16 %v1560, %v1560
        %v1562 = vld [vmem:[%s13] sm:$0xf]
        %v1563 = vld [vmem:[%s13 + $0x4] sm:$0xf]
        %v1564 = vld [vmem:[%s13 + $0x8] sm:$0xf]
        %v1565 = vld [vmem:[%s13 + $0xc] sm:$0xf]
        %v1566 = vld [vmem:[%s13 + $0x10] sm:$0xf]
        %v1567 = vld [vmem:[%s13 + $0x14] sm:$0xf]
        %v1568 = vld [vmem:[%s13 + $0x18] sm:$0xf]
        %v1569 = vld [vmem:[%s13 + $0x1c] sm:$0xf]
        %v1570 = vld [vmem:[%s14] sm:$0x1]
        %v1572 = vlaneseq
        %v1573 = vshrl.u32 %v1572, 7
        %v1574 = vsub.s32 0, %v1573
        %v1575 = vrot.slane %v1570, %v1574
        %v1585 = vunpack.c.l.b16 %v1562
        %v1586 = vunpack.c.l.b16 %v1563
        %v1587 = vunpack.c.l.b16 %v1564
        %v1588 = vunpack.c.l.b16 %v1565
        %v1589 = vunpack.c.l.b16 %v1566
        %v1590 = vunpack.c.l.b16 %v1567
        %v1591 = vunpack.c.l.b16 %v1568
        %v1592 = vunpack.c.l.b16 %v1569
        %v1593 = vpack.c.b16 %v1586, %v1585
        %v1594 = vpack.c.b16 %v1588, %v1587
        %v1595 = vpack.c.b16 %v1590, %v1589
        %v1596 = vpack.c.b16 %v1592, %v1591
        %vm1601 = vcmask 523264
        %v1603 = vsel %vm1601, %v1561, 0
        %1605 = vmatprep.subr.bf16.mxu0 0
        %1606 = vmatpush1.bf16.msra.mxu0 %v1593
        %1607 = vmatprep.subr.bf16.mxu0 0
        %1608 = vmatpush1.bf16.msra.mxu0 %v1594
        %1609 = vmatprep.subr.bf16.mxu0 0
        %1610 = vmatpush1.bf16.msra.mxu0 %v1595
        %1611 = vmatprep.subr.bf16.mxu0 0
        %1612 = vmatpush1.bf16.msra.mxu0 %v1596
        %1613 = vmatprep.subr.bf16.mxu0 0
        %1614 = vmatpush1.bf16.msra.mxu0 0
        %1615 = vmatprep.subr.bf16.mxu0 0
        %1616 = vmatpush1.bf16.msra.mxu0 0
        %1617 = vmatprep.subr.bf16.mxu0 0
        %1618 = vmatpush1.bf16.msra.mxu0 0
        %1619 = vmatprep.subr.bf16.mxu0 0
        %1620 = vmatpush1.bf16.msra.mxu0 0
        %1621 = vmatprep.subr.bf16.mxu0 0
        %1622 = vmatpush1.bf16.msra.mxu0 0
        %1623 = vmatprep.subr.bf16.mxu0 0
        %1624 = vmatpush1.bf16.msra.mxu0 0
        %1625 = vmatprep.subr.bf16.mxu0 0
        %1626 = vmatpush1.bf16.msra.mxu0 0
        %1627 = vmatprep.subr.bf16.mxu0 0
        %1628 = vmatpush1.bf16.msra.mxu0 0
        %1629 = vmatprep.subr.bf16.mxu0 0
        %1630 = vmatpush1.bf16.msra.mxu0 0
        %1631 = vmatprep.subr.bf16.mxu0 0
        %1632 = vmatpush1.bf16.msra.mxu0 0
        %1633 = vmatprep.subr.bf16.mxu0 0
        %1634 = vmatpush1.bf16.msra.mxu0 0
        %1635 = vmatprep.subr.bf16.mxu0 0
        %1636 = vmatpush1.bf16.msra.mxu0 0
        %1637 = vmatprep.mubr.bf16.mxu0 0
        %1638 = vmatmul.mubr.bf16.gmra.mrb[0].mxu0 %v1603
        %v1639 = vpop.f32.mrb[0].mxu0
        %v1640 = vadd.f32 %v1575, %v1639
        %v1641 = vpop.f32.mrb[0].mxu0
        %v1642 = vpop.f32.mrb[0].mxu0
        %v1643 = vpop.f32.mrb[0].mxu0
        %1644 = vdwg.mxu0
        %v1645 = vadd.f32 %v1472, %v1640
        %1646 = vst.msk [vmem:[%s622] sm:$0xff] %vm842, %v1645
        %s1647 = sand.u32 %s389, 1
        %s1648 = scalar_lea.sflag [#allocation7], %s1647
        %s1649 = sand.u32 %s389, 1
        %s1650 = smul.addr %s1649, 8
        %s1651 = scalar_lea.vmem [#allocation16], %s1650
        // Predicated region
        $region109: #{tpu_custom_call.1} parent=79 // pred_check
          %p1652 = pneg %p399
        $region110: #{tpu_custom_call.1} parent=79 // pred_check_branch
          %1654 = sbr.rel (%p1652) target = $region112
        $region111: #{tpu_custom_call.1} parent=79 // pred_region
          %s1656 = ssub.s32 128, 128
          %1657 = vsyncadd %s1648, %s1656
          %s1658 = sadd.s32 %s40, %s39
          %s1659 = smul.addr %s1658, 128
          %s1660 = scalar_lea.hbm %s15, %s1659
          %s1662 = sshll.u32 %s1651, 4
          %s1663 = int_to_ptr.vmem [resolvable:$true] %s1662
          %1665 = dma.vmem_to_hbm [thread:$0]  %s1663, 128, %s1660, %s1648
        $region112: #{tpu_custom_call.1} parent=79 // pred_fallthru
          _
      $region80: #{tpu_custom_call.1} parent=5 // pred_fallthru
        _
      %p1666 = scmp.le.s32.totalorder 2, %s30
      // Predicated region
      $region113: #{tpu_custom_call.1} parent=5 // pred_check
        %p1667 = pneg %p1666
      $region114: #{tpu_custom_call.1} parent=5 // pred_check_branch
        %1669 = sbr.rel (%p1667) target = $region116
      $region115: #{tpu_custom_call.1} parent=5 // pred_region
        %s1670 = ssub.s32 %s30, 2
        // Predicated region
        $region117: #{tpu_custom_call.1} parent=115 // pred_check
          %p1671 = pneg %p405
        $region118: #{tpu_custom_call.1} parent=115 // pred_check_branch
          %1673 = sbr.rel (%p1671) target = $region120
        $region119: #{tpu_custom_call.1} parent=115 // pred_region
          %s1674 = sand.u32 %s390, 1
          %s1675 = scalar_lea.sflag [#allocation7], %s1674
          %s1676 = sand.u32 %s390, 1
          %s1677 = smul.addr %s1676, 8
          %s1678 = scalar_lea.vmem [#allocation16], %s1677
          %1679 = dma.done %s1675, 128
        $region120: #{tpu_custom_call.1} parent=115 // pred_fallthru
          _
      $region116: #{tpu_custom_call.1} parent=5 // pred_fallthru
        _
    $region6: #{tpu_custom_call.1} parent=1 // loop_footer
      %s34 = sadd.s32 1, %s30
    $region7: #{tpu_custom_call.1} parent=1 // loop_footer_branch
      %29 = sbr.rel target = $region3
    $region8: #{tpu_custom_call.1} parent=1 // loop_exit
      _
    %1680 = vsyncpa [#allocation6], 1
    %s1681 = scalar_lea.sflag [#allocation6], 1
    %1682 = vsyncpa %s1681, 1
    %1683 = vsyncpa [#allocation9], 1
    %1684 = vsyncpa [#allocation12], 1
    %1685 = vsyncpa [#allocation15], 1
    %1686 = vsyncpa [#allocation7], 1
    %s1687 = scalar_lea.sflag [#allocation7], 1
    %1688 = vsyncpa %s1687, 1

</llo_original>
